<compile_context>
chip_gen: v7x
topology: tpu7x:2x2x1
jax: 0.10.0
libtpu: 0.0.40
codegen_flags: <defaults>
</compile_context>

<pallas_src>
import functools
import math

import jax
import jax.numpy as jnp
from jax import lax
from jax.experimental import pallas as pl
from jax.experimental.pallas import tpu as pltpu


# ----------------------------- shared math ---------------------------------

def _layernorm(x, g, b, eps):
    mu = jnp.mean(x, axis=-1, keepdims=True)
    var = jnp.mean(jnp.square(x - mu), axis=-1, keepdims=True)
    return (x - mu) * lax.rsqrt(var + eps) * g + b


def _gelu_new(x):
    # HF ACT2FN["gelu_new"]: tanh approximation of GELU
    c = math.sqrt(2.0 / math.pi)
    return 0.5 * x * (1.0 + jnp.tanh(c * (x + 0.044715 * x * x * x)))


# ------------------------------- kernel ------------------------------------

def _integrative_kernel(
    hs_ref, hsb_ref, qcb_ref, kvb_ref, mask_ref,
    wqh_ref, wqc_ref, wk_ref, wv_ref, wo_ref, bqkv_ref,
    wih_ref, wic_ref, wo2_ref, vecH_ref, bi_ref,
    out_ref,
    acc_ref, q_scr, k_scr, v_scr, ctx_scr,
    *, eps, heads_per_group, head_dim,
):
    f32 = jnp.float32
    bf16 = jnp.bfloat16
    g_idx = pl.program_id(2)
    last_g = pl.num_programs(2) - 1

    @pl.when(g_idx == 0)
    def _():
        acc_ref[...] = jnp.zeros_like(acc_ref)

    hs_b = hsb_ref[0]                   # (tq,  H)   bf16
    qc_b = qcb_ref[0]                   # (tq,  Hqc) bf16
    kv_b = kvb_ref[0]                   # (Skv, Hkv) bf16
    mask = mask_ref[0]                  # (1,   Skv) fp32 additive (kept fp32)
    bqkv = bqkv_ref[0]                  # (3,   ghd) fp32: [bq*scale, bk, bv]

    # Grouped projections: N = group*hd fills the MXU lanes (vs per-head hd).
    # 1/sqrt(hd) is already folded into Wq/bq by the wrapper.
    q_scr[...] = (jnp.dot(hs_b, wqh_ref[0], preferred_element_type=f32)
                  + jnp.dot(qc_b, wqc_ref[0], preferred_element_type=f32)
                  + bqkv[0:1]).astype(bf16)
    k_scr[...] = (jnp.dot(kv_b, wk_ref[0], preferred_element_type=f32)
                  + bqkv[1:2]).astype(bf16)
    v_scr[...] = (jnp.dot(kv_b, wv_ref[0], preferred_element_type=f32)
                  + bqkv[2:3]).astype(bf16)

    # Per-head scores / softmax / context inside the group (static unroll over
    # the small group; the score matmul's contraction dim is inherently hd).
    # TODO(synk): at production Skv, consider also tiling Skv (flash style) to
    # bound the (tq, Skv) score tensor; and verify in the Mosaic dump that the
    # (1,1)-contraction below does not emit a per-head XLU transpose of K.
    for h in range(heads_per_group):
        lo = h * head_dim
        hi = lo + head_dim
        qh = q_scr[:, lo:hi]            # (tq,  hd) bf16
        kh = k_scr[:, lo:hi]            # (Skv, hd) bf16
        vh = v_scr[:, lo:hi]            # (Skv, hd) bf16
        s = lax.dot_general(qh, kh, (((1,), (1,)), ((), ())),
                            preferred_element_type=f32)          # (tq, Skv)
        s = s + mask
        e = jnp.exp(s - jnp.max(s, axis=-1, keepdims=True))
        p = e * pl.reciprocal(jnp.sum(e, axis=-1, keepdims=True), approx=False)
        ctx_scr[:, lo:hi] = jnp.dot(p.astype(bf16), vh,
                                    preferred_element_type=f32).astype(bf16)

    # Grouped output projection: acc += ctx_group @ Wo_group  (K = group*hd).
    acc_ref[...] += jnp.dot(ctx_scr[...], wo_ref[0],
                            preferred_element_type=f32)

    @pl.when(g_idx == last_g)
    def _():
        vec = vecH_ref[...]             # (6, H) fp32 packed small params
        bo, ln1g, ln1b = vec[0:1], vec[1:2], vec[2:3]
        bo2, ln2g, ln2b = vec[3:4], vec[4:5], vec[5:6]

        # x3 = lnorm_attn(dropout(output_attn(ctx)) + hidden_states)
        hs = hs_ref[0]                  # fp32 residual
        x3 = _layernorm(acc_ref[...] + bo + hs, ln1g, ln1b, eps)

        # intermediate = act(Linear(cat(x3, query_to_concat)))  (weight split)
        x3_b = x3.astype(bf16)
        inter = (jnp.dot(x3_b, wih_ref[...], preferred_element_type=f32)
                 + jnp.dot(qc_b, wic_ref[...], preferred_element_type=f32)
                 + bi_ref[...])
        # TODO(synk): on v6e/v7x the exp/tanh transcendentals could run on bf16
        # inputs (~2x EUP throughput); kept fp32 here for v5e portability.
        inter = _gelu_new(inter)

        # out = lnorm_intm(dropout(output_intm(inter)) + x3)
        y = (jnp.dot(inter.astype(bf16), wo2_ref[...],
                     preferred_element_type=f32) + bo2)
        out_ref[0] = _layernorm(y + x3, ln2g, ln2b, eps).astype(out_ref.dtype)


# ------------------------------- wrapper ------------------------------------

def _pick_head_group(num_heads, head_dim, min_lanes=256):
    # smallest divisor of num_heads such that group*head_dim >= min_lanes,
    # else all heads in one group (toy shapes).
    for g in range(1, num_heads + 1):
        if num_heads % g == 0 and g * head_dim >= min_lanes:
            return g
    return num_heads


def _pick_sq_tile(sq):
    for t in (256, 128):
        if sq % t == 0:
            return t
    return sq


def _tile_padded_bytes(shape, itemsize):
    # pad the last two dims to the native VMEM tile ((8,128) f32 / (16,128) bf16)
    s = list(shape)
    if len(s) == 1:
        s = [1] + s
    sub = 8 * (4 // itemsize)
    s[-1] = -(-s[-1] // 128) * 128
    s[-2] = -(-s[-2] // sub) * sub
    n = 1
    for d in s:
        n *= d
    return n * itemsize


def bert_integrative_layer(hs, qc, kv, mask, params, *, num_heads, eps=1e-12):
    B, Sq, H = hs.shape
    _, Skv, Hkv = kv.shape
    Hqc = qc.shape[-1]
    assert H % num_heads == 0
    assert qc.shape[1] == Sq
    assert params["wq"].shape == (H + Hqc, H)
    nh = num_heads
    hd = H // nh
    I = params["wi"].shape[1]
    scale = 1.0 / math.sqrt(hd)
    bf16, f32 = jnp.bfloat16, jnp.float32

    # additive mask: accept (B,1,Skv) or HF-extended (B,1,1,Skv).
    if mask.ndim == 4 and mask.shape[1] == 1 and mask.shape[2] == 1:
        mask = mask.reshape(mask.shape[0], 1, mask.shape[3])
    assert mask.shape == (B, 1, Skv), (
        f"attention_mask must be additive (B,1,Skv) or (B,1,1,Skv); got {mask.shape}")
    mask = mask.astype(f32)

    grp = _pick_head_group(nh, hd)          # heads per grid step
    ngrp = nh // grp
    ghd = grp * hd
    tq = _pick_sq_tile(Sq)
    n_tq = Sq // tq

    def to_groups(w):                       # (In, nh*hd) -> (ngrp, In, grp*hd)
        return w.reshape(w.shape[0], ngrp, ghd).transpose(1, 0, 2)

    # fold 1/sqrt(hd) into the query projection; split the concat-consuming
    # weights (rows [:H] -> hidden/x3 part, rows [H:] -> query_to_concat part).
    wq = params["wq"] * scale
    bq = params["bq"] * scale
    wq_h_g = to_groups(wq[:H]).astype(bf16)              # (ngrp, H,   ghd)
    wq_c_g = to_groups(wq[H:]).astype(bf16)              # (ngrp, Hqc, ghd)
    wk_g = to_groups(params["wk"]).astype(bf16)          # (ngrp, Hkv, ghd)
    wv_g = to_groups(params["wv"]).astype(bf16)          # (ngrp, Hkv, ghd)
    wo_g = params["wo"].reshape(ngrp, ghd, H).astype(bf16)

    bqkv_g = jnp.stack(
        [bq.reshape(ngrp, ghd),
         params["bk"].reshape(ngrp, ghd),
         params["bv"].reshape(ngrp, ghd)], axis=1).astype(f32)   # (ngrp, 3, ghd)

    wi_h = params["wi"][:H].astype(bf16)                 # (H,   I)
    wi_c = params["wi"][H:].astype(bf16)                 # (Hqc, I)
    wo2 = params["wo2"].astype(bf16)                     # (I,   H)
    vecH = jnp.concatenate(
        [params["bo"], params["ln1_g"], params["ln1_b"],
         params["bo2"], params["ln2_g"], params["ln2_b"]], axis=0).astype(f32)
    bi = params["bi"].astype(f32)                        # (1, I)

    # bf16 activation copies fed from HBM (cast once, half the DMA bytes);
    # fp32 hidden_states kept only for the residual / LayerNorm.
    hs_bf = hs.astype(bf16)
    qc_bf = qc.astype(bf16)
    kv_bf = kv.astype(bf16)

    def act_seq(feat):      # activation block tiled over (batch, sq-tile)
        return pl.BlockSpec((1, tq, feat), lambda b, sq, g: (b, sq, 0))

    def act_kv(s1, s2):     # activation block constant across sq/group
        return pl.BlockSpec((1, s1, s2), lambda b, sq, g: (b, 0, 0))

    def grp_spec(s1, s2):   # per-head-group weight block (reduction axis)
        return pl.BlockSpec((1, s1, s2), lambda b, sq, g: (g, 0, 0))

    # constant epilogue operands: one resident VMEM copy (no double-buffering).
    const_spec = pl.BlockSpec(memory_space=pltpu.MemorySpace.VMEM)

    in_specs = [
        act_seq(H), act_seq(H), act_seq(Hqc),
        act_kv(Skv, Hkv), act_kv(1, Skv),
        grp_spec(H, ghd), grp_spec(Hqc, ghd), grp_spec(Hkv, ghd),
        grp_spec(Hkv, ghd), grp_spec(ghd, H), grp_spec(3, ghd),
        const_spec, const_spec, const_spec, const_spec, const_spec,
    ]

    # per-step resident VMEM footprint (tile-padded): x2 for pipelined blocks,
    # x1 for resident constants, + scratch + output block; cap below physical
    # VMEM (v7x: 64 MiB) with headroom for Mosaic internal scratch.
    bb = _tile_padded_bytes
    out_isz = jnp.dtype(hs.dtype).itemsize
    resident = (
        2 * (bb((tq, H), 4) + bb((tq, H), 2) + bb((tq, Hqc), 2)
             + bb((Skv, Hkv), 2) + bb((1, Skv), 4))
        + 2 * (bb((H, ghd), 2) + bb((Hqc, ghd), 2) + 2 * bb((Hkv, ghd), 2)
               + bb((ghd, H), 2) + bb((3, ghd), 4))
        + (bb((H, I), 2) + bb((Hqc, I), 2) + bb((I, H), 2)
           + bb((6, H), 4) + bb((1, I), 4))
        + 2 * bb((tq, H), out_isz)
        + bb((tq, H), 4) + 2 * bb((tq, ghd), 2) + 2 * bb((Skv, ghd), 2)
    )
    vmem_limit = int(min(56 << 20, max(32 << 20, int(1.3 * resident) + (4 << 20))))

    kernel = functools.partial(_integrative_kernel, eps=eps,
                               heads_per_group=grp, head_dim=hd)

    # TODO(synk): at production sizes keep H (and ideally I, Skv) multiples of
    # 128 so the output store and FFN matmuls stay lane-dense; on v7x the FFN
    # epilogue could be split into a second, K/N-tiled pallas_call so the FFN
    # weights are not resident during the attention steps.
    return pl.pallas_call(
        kernel,
        out_shape=jax.ShapeDtypeStruct((B, Sq, H), hs.dtype),
        grid_spec=pltpu.PrefetchScalarGridSpec(
            num_scalar_prefetch=0,
            grid=(B, n_tq, ngrp),
            in_specs=in_specs,
            out_specs=pl.BlockSpec((1, tq, H), lambda b, sq, g: (b, sq, 0)),
            scratch_shapes=[
                pltpu.VMEM((tq, H), jnp.float32),       # Wo accumulator
                pltpu.VMEM((tq, ghd), jnp.bfloat16),    # Q group
                pltpu.VMEM((Skv, ghd), jnp.bfloat16),   # K group
                pltpu.VMEM((Skv, ghd), jnp.bfloat16),   # V group
                pltpu.VMEM((tq, ghd), jnp.bfloat16),    # ctx group
            ]),
        compiler_params=pltpu.CompilerParams(
            dimension_semantics=("parallel", "parallel", "arbitrary"),
            vmem_limit_bytes=vmem_limit,
        ),
    )(hs, hs_bf, qc_bf, kv_bf, mask,
      wq_h_g, wq_c_g, wk_g, wv_g, wo_g, bqkv_g,
      wi_h, wi_c, wo2, vecH, bi)


# --------------------------- pure-JAX reference -----------------------------

def reference(hs, qc, kv, mask, params, *, num_heads, eps=1e-12):
    B, Sq, H = hs.shape
    head_dim = H // num_heads
    q_in = jnp.concatenate([hs, qc], axis=-1)
    q = q_in @ params["wq"] + params["bq"]
    k = kv @ params["wk"] + params["bk"]
    v = kv @ params["wv"] + params["bv"]

    def split_heads(x):
        b, s, _ = x.shape
        return x.reshape(b, s, num_heads, head_dim).transpose(0, 2, 1, 3)

    qh, kh, vh = split_heads(q), split_heads(k), split_heads(v)
    s = jnp.einsum("bhqd,bhkd->bhqk", qh, kh) / math.sqrt(head_dim)
    s = s + mask[:, None, :, :]
    p = jax.nn.softmax(s, axis=-1)
    ctx = jnp.einsum("bhqk,bhkd->bhqd", p, vh)
    ctx = ctx.transpose(0, 2, 1, 3).reshape(B, Sq, H)

    attn_out = ctx @ params["wo"] + params["bo"]
    x3 = _layernorm(attn_out + hs, params["ln1_g"], params["ln1_b"], eps)

    inter = jnp.concatenate([x3, qc], axis=-1) @ params["wi"] + params["bi"]
    inter = _gelu_new(inter)
    out = inter @ params["wo2"] + params["bo2"]
    return _layernorm(out + x3, params["ln2_g"], params["ln2_b"], eps)


# ------------------------------- params -------------------------------------

def init_params(key, H, Hkv, Hqc, I, dtype=jnp.float32):
    Hq_in = H + Hqc           # hidden_size_query == hidden_size_concat
    ks = jax.random.split(key, 12)
    n = lambda k, shape, s=0.02: (jax.random.normal(k, shape, dtype) * s)
    return {
        "wq": n(ks[0], (Hq_in, H)), "bq": n(ks[1], (1, H), 0.01),
        "wk": n(ks[2], (Hkv, H)),   "bk": n(ks[3], (1, H), 0.01),
        "wv": n(ks[4], (Hkv, H)),   "bv": n(ks[5], (1, H), 0.01),
        "wo": n(ks[6], (H, H)),     "bo": n(ks[7], (1, H), 0.01),
        "ln1_g": jnp.ones((1, H), dtype), "ln1_b": jnp.zeros((1, H), dtype),
        "wi": n(ks[8], (Hq_in, I)), "bi": n(ks[9], (1, I), 0.01),
        "wo2": n(ks[10], (I, H)),   "bo2": n(ks[11], (1, H), 0.01),
        "ln2_g": jnp.ones((1, H), dtype), "ln2_b": jnp.zeros((1, H), dtype),
    }


# --------------------------------- main --------------------------------------

if __name__ == "__main__":
    # small config: hidden_size=32, hidden_size_keyvalues=48,
    # hidden_size_query_to_concat=48 (default), intermediate_size=128, 4 heads.
    B, Sq, Skv = 2, 8, 16
    H, Hkv, Hqc, I = 32, 48, 48, 128
    num_heads = 4
    eps = 1e-12

    key = jax.random.PRNGKey(0)
    k_p, k_hs, k_qc, k_kv = jax.random.split(key, 4)
    params = init_params(k_p, H, Hkv, Hqc, I)

    hidden_states = jax.random.normal(k_hs, (B, Sq, H), jnp.float32)
    query_to_concat = jax.random.normal(k_qc, (B, Sq, Hqc), jnp.float32)
    keyvalue_hidden = jax.random.normal(k_kv, (B, Skv, Hkv), jnp.float32)

    # additive attention mask over key/value positions: mask out last 4 kv
    # positions of the second batch element.
    attention_mask = jnp.zeros((B, 1, Skv), jnp.float32)
    attention_mask = attention_mask.at[1, 0, 12:].set(-1e9)

    out = bert_integrative_layer(hidden_states, query_to_concat, keyvalue_hidden,
                                 attention_mask, params,
                                 num_heads=num_heads, eps=eps)
    out = jax.block_until_ready(out)

    ref = reference(hidden_states, query_to_concat, keyvalue_hidden,
                    attention_mask, params, num_heads=num_heads, eps=eps)
    assert out.shape == (B, Sq, H)
    # bf16 MXU operands -> loosened tolerance vs the fp32 reference.
    assert jnp.allclose(out, ref, rtol=2e-2, atol=2e-2), "mismatch vs JAX reference"

    # TODO(synk): dropout layers are treated as identity (eval mode); training-mode
    # dropout RNG is not implemented.
    print("KERNEL_OK")
</pallas_src>

<mosaic_0001>
module attributes {stable_mosaic.version = 11 : i64} {
  func.func @_integrative_kernel(%arg0: i32, %arg1: i32, %arg2: i32, %arg3: memref<1x8x32xf32, #tpu.memory_space<vmem>>, %arg4: memref<1x8x32xbf16, #tpu.memory_space<vmem>>, %arg5: memref<1x8x48xbf16, #tpu.memory_space<vmem>>, %arg6: memref<1x16x48xbf16, #tpu.memory_space<vmem>>, %arg7: memref<1x1x16xf32, #tpu.memory_space<vmem>>, %arg8: memref<1x32x32xbf16, #tpu.memory_space<vmem>>, %arg9: memref<1x48x32xbf16, #tpu.memory_space<vmem>>, %arg10: memref<1x48x32xbf16, #tpu.memory_space<vmem>>, %arg11: memref<1x48x32xbf16, #tpu.memory_space<vmem>>, %arg12: memref<1x32x32xbf16, #tpu.memory_space<vmem>>, %arg13: memref<1x3x32xf32, #tpu.memory_space<vmem>>, %arg14: memref<32x128xbf16, #tpu.memory_space<vmem>>, %arg15: memref<48x128xbf16, #tpu.memory_space<vmem>>, %arg16: memref<128x32xbf16, #tpu.memory_space<vmem>>, %arg17: memref<6x32xf32, #tpu.memory_space<vmem>>, %arg18: memref<1x128xf32, #tpu.memory_space<vmem>>, %arg19: memref<1x8x32xf32, #tpu.memory_space<vmem>>, %arg20: memref<8x32xf32, #tpu.memory_space<vmem>>, %arg21: memref<8x32xbf16, #tpu.memory_space<vmem>>, %arg22: memref<16x32xbf16, #tpu.memory_space<vmem>>, %arg23: memref<16x32xbf16, #tpu.memory_space<vmem>>, %arg24: memref<8x32xbf16, #tpu.memory_space<vmem>>) attributes {dimension_semantics = [#tpu.dimension_semantics<parallel>, #tpu.dimension_semantics<parallel>, #tpu.dimension_semantics<arbitrary>], iteration_bounds = array<i64: 2, 1, 1>, scalar_prefetch = 0 : i64, scratch_operands = 5 : i64, tpu.core_type = #tpu.core_type<tc>, window_params = [{transform_indices = @transform_0, window_bounds = array<i64: 1, 8, 32>}, {transform_indices = @transform_1, window_bounds = array<i64: 1, 8, 32>}, {transform_indices = @transform_2, window_bounds = array<i64: 1, 8, 48>}, {transform_indices = @transform_3, window_bounds = array<i64: 1, 16, 48>}, {transform_indices = @transform_4, window_bounds = array<i64: 1, 1, 16>}, {transform_indices = @transform_5, window_bounds = array<i64: 1, 32, 32>}, {transform_indices = @transform_6, window_bounds = array<i64: 1, 48, 32>}, {transform_indices = @transform_7, window_bounds = array<i64: 1, 48, 32>}, {transform_indices = @transform_8, window_bounds = array<i64: 1, 48, 32>}, {transform_indices = @transform_9, window_bounds = array<i64: 1, 32, 32>}, {transform_indices = @transform_10, window_bounds = array<i64: 1, 3, 32>}, {pipeline_mode = #tpu.pipeline_mode<synchronous>, transform_indices = @transform_11, window_bounds = array<i64: 32, 128>}, {pipeline_mode = #tpu.pipeline_mode<synchronous>, transform_indices = @transform_12, window_bounds = array<i64: 48, 128>}, {pipeline_mode = #tpu.pipeline_mode<synchronous>, transform_indices = @transform_13, window_bounds = array<i64: 128, 32>}, {pipeline_mode = #tpu.pipeline_mode<synchronous>, transform_indices = @transform_14, window_bounds = array<i64: 6, 32>}, {pipeline_mode = #tpu.pipeline_mode<synchronous>, transform_indices = @transform_15, window_bounds = array<i64: 1, 128>}, {transform_indices = @transform_16, window_bounds = array<i64: 1, 8, 32>}]} {
    %c0_i32 = arith.constant 0 : i32
    %0 = arith.cmpi eq, %arg2, %c0_i32 : i32
    %1 = arith.extui %0 : i1 to i32
    %c0_i32_0 = arith.constant 0 : i32
    %2 = arith.cmpi ne, %1, %c0_i32_0 : i32
    scf.if %2 {
      %cst_93 = arith.constant 0.000000e+00 : f32
      %131 = vector.broadcast %cst_93 : f32 to vector<8x32xf32>
      %c0_94 = arith.constant 0 : index
      %c0_95 = arith.constant 0 : index
      %132 = vector.load %arg20[%c0_94, %c0_95] : memref<8x32xf32, #tpu.memory_space<vmem>>, vector<8x32xf32>
      tpu.vector_store %arg20[%c0_94, %c0_95], %131 {strides = array<i32>} : memref<8x32xf32, #tpu.memory_space<vmem>>, vector<8x32xf32>,
    } else {
    }
    %c0 = arith.constant 0 : index
    %c0_1 = arith.constant 0 : index
    %c0_2 = arith.constant 0 : index
    %3 = vector.load %arg4[%c0, %c0_1, %c0_2] : memref<1x8x32xbf16, #tpu.memory_space<vmem>>, vector<1x8x32xbf16>
    %4 = vector.shape_cast %3 : vector<1x8x32xbf16> to vector<8x32xbf16>
    %c0_3 = arith.constant 0 : index
    %c0_4 = arith.constant 0 : index
    %c0_5 = arith.constant 0 : index
    %5 = vector.load %arg5[%c0_3, %c0_4, %c0_5] : memref<1x8x48xbf16, #tpu.memory_space<vmem>>, vector<1x8x48xbf16>
    %6 = vector.shape_cast %5 : vector<1x8x48xbf16> to vector<8x48xbf16>
    %c0_6 = arith.constant 0 : index
    %c0_7 = arith.constant 0 : index
    %c0_8 = arith.constant 0 : index
    %7 = vector.load %arg6[%c0_6, %c0_7, %c0_8] : memref<1x16x48xbf16, #tpu.memory_space<vmem>>, vector<1x16x48xbf16>
    %8 = vector.shape_cast %7 : vector<1x16x48xbf16> to vector<16x48xbf16>
    %c0_9 = arith.constant 0 : index
    %c0_10 = arith.constant 0 : index
    %c0_11 = arith.constant 0 : index
    %9 = vector.load %arg7[%c0_9, %c0_10, %c0_11] : memref<1x1x16xf32, #tpu.memory_space<vmem>>, vector<1x1x16xf32>
    %10 = vector.shape_cast %9 : vector<1x1x16xf32> to vector<1x16xf32>
    %c0_12 = arith.constant 0 : index
    %c0_13 = arith.constant 0 : index
    %c0_14 = arith.constant 0 : index
    %11 = vector.load %arg13[%c0_12, %c0_13, %c0_14] : memref<1x3x32xf32, #tpu.memory_space<vmem>>, vector<1x3x32xf32>
    %12 = vector.shape_cast %11 : vector<1x3x32xf32> to vector<3x32xf32>
    %c0_15 = arith.constant 0 : index
    %c0_16 = arith.constant 0 : index
    %c0_17 = arith.constant 0 : index
    %13 = vector.load %arg8[%c0_15, %c0_16, %c0_17] : memref<1x32x32xbf16, #tpu.memory_space<vmem>>, vector<1x32x32xbf16>
    %14 = vector.shape_cast %13 : vector<1x32x32xbf16> to vector<32x32xbf16>
    %cst = arith.constant dense<0.000000e+00> : vector<8x32xf32>
    %15 = tpu.matmul %4, %14, %cst {dimension_numbers = #tpu.dot_dimension_numbers<[1], [0], [0], [1], [0, 0, 1, 1], [], []>} : vector<8x32xbf16>, vector<32x32xbf16>, vector<8x32xf32> -> vector<8x32xf32>
    %c0_18 = arith.constant 0 : index
    %c0_19 = arith.constant 0 : index
    %c0_20 = arith.constant 0 : index
    %16 = vector.load %arg9[%c0_18, %c0_19, %c0_20] : memref<1x48x32xbf16, #tpu.memory_space<vmem>>, vector<1x48x32xbf16>
    %17 = vector.shape_cast %16 : vector<1x48x32xbf16> to vector<48x32xbf16>
    %cst_21 = arith.constant dense<0.000000e+00> : vector<8x32xf32>
    %18 = tpu.matmul %6, %17, %cst_21 {dimension_numbers = #tpu.dot_dimension_numbers<[1], [0], [0], [1], [0, 0, 1, 1], [], []>} : vector<8x48xbf16>, vector<48x32xbf16>, vector<8x32xf32> -> vector<8x32xf32>
    %19 = arith.addf %15, %18 : vector<8x32xf32>
    %20 = vector.extract_strided_slice %12 {offsets = [0, 0], sizes = [1, 32], strides = [1, 1]} : vector<3x32xf32> to vector<1x32xf32>
    %21 = vector.broadcast %20 : vector<1x32xf32> to vector<8x32xf32>
    %22 = arith.addf %19, %21 : vector<8x32xf32>
    %23 = arith.truncf %22 : vector<8x32xf32> to vector<8x32xbf16>
    %c0_22 = arith.constant 0 : index
    %c0_23 = arith.constant 0 : index
    %24 = vector.load %arg21[%c0_22, %c0_23] : memref<8x32xbf16, #tpu.memory_space<vmem>>, vector<8x32xbf16>
    tpu.vector_store %arg21[%c0_22, %c0_23], %23 {strides = array<i32>} : memref<8x32xbf16, #tpu.memory_space<vmem>>, vector<8x32xbf16>,
    %c0_24 = arith.constant 0 : index
    %c0_25 = arith.constant 0 : index
    %c0_26 = arith.constant 0 : index
    %25 = vector.load %arg10[%c0_24, %c0_25, %c0_26] : memref<1x48x32xbf16, #tpu.memory_space<vmem>>, vector<1x48x32xbf16>
    %26 = vector.shape_cast %25 : vector<1x48x32xbf16> to vector<48x32xbf16>
    %cst_27 = arith.constant dense<0.000000e+00> : vector<16x32xf32>
    %27 = tpu.matmul %8, %26, %cst_27 {dimension_numbers = #tpu.dot_dimension_numbers<[1], [0], [0], [1], [0, 0, 1, 1], [], []>} : vector<16x48xbf16>, vector<48x32xbf16>, vector<16x32xf32> -> vector<16x32xf32>
    %28 = vector.extract_strided_slice %12 {offsets = [1, 0], sizes = [1, 32], strides = [1, 1]} : vector<3x32xf32> to vector<1x32xf32>
    %29 = vector.broadcast %28 : vector<1x32xf32> to vector<16x32xf32>
    %30 = arith.addf %27, %29 : vector<16x32xf32>
    %31 = arith.truncf %30 : vector<16x32xf32> to vector<16x32xbf16>
    %c0_28 = arith.constant 0 : index
    %c0_29 = arith.constant 0 : index
    %32 = vector.load %arg22[%c0_28, %c0_29] : memref<16x32xbf16, #tpu.memory_space<vmem>>, vector<16x32xbf16>
    tpu.vector_store %arg22[%c0_28, %c0_29], %31 {strides = array<i32>} : memref<16x32xbf16, #tpu.memory_space<vmem>>, vector<16x32xbf16>,
    %c0_30 = arith.constant 0 : index
    %c0_31 = arith.constant 0 : index
    %c0_32 = arith.constant 0 : index
    %33 = vector.load %arg11[%c0_30, %c0_31, %c0_32] : memref<1x48x32xbf16, #tpu.memory_space<vmem>>, vector<1x48x32xbf16>
    %34 = vector.shape_cast %33 : vector<1x48x32xbf16> to vector<48x32xbf16>
    %cst_33 = arith.constant dense<0.000000e+00> : vector<16x32xf32>
    %35 = tpu.matmul %8, %34, %cst_33 {dimension_numbers = #tpu.dot_dimension_numbers<[1], [0], [0], [1], [0, 0, 1, 1], [], []>} : vector<16x48xbf16>, vector<48x32xbf16>, vector<16x32xf32> -> vector<16x32xf32>
    %36 = vector.extract_strided_slice %12 {offsets = [2, 0], sizes = [1, 32], strides = [1, 1]} : vector<3x32xf32> to vector<1x32xf32>
    %37 = vector.broadcast %36 : vector<1x32xf32> to vector<16x32xf32>
    %38 = arith.addf %35, %37 : vector<16x32xf32>
    %39 = arith.truncf %38 : vector<16x32xf32> to vector<16x32xbf16>
    %c0_34 = arith.constant 0 : index
    %c0_35 = arith.constant 0 : index
    %40 = vector.load %arg23[%c0_34, %c0_35] : memref<16x32xbf16, #tpu.memory_space<vmem>>, vector<16x32xbf16>
    tpu.vector_store %arg23[%c0_34, %c0_35], %39 {strides = array<i32>} : memref<16x32xbf16, #tpu.memory_space<vmem>>, vector<16x32xbf16>,
    %c0_36 = arith.constant 0 : index
    %c0_37 = arith.constant 0 : index
    %41 = vector.load %arg21[%c0_36, %c0_37] : memref<8x32xbf16, #tpu.memory_space<vmem>>, vector<8x8xbf16>
    %c0_38 = arith.constant 0 : index
    %c0_39 = arith.constant 0 : index
    %42 = vector.load %arg22[%c0_38, %c0_39] : memref<16x32xbf16, #tpu.memory_space<vmem>>, vector<16x8xbf16>
    %c0_40 = arith.constant 0 : index
    %c0_41 = arith.constant 0 : index
    %43 = vector.load %arg23[%c0_40, %c0_41] : memref<16x32xbf16, #tpu.memory_space<vmem>>, vector<16x8xbf16>
    %cst_42 = arith.constant dense<0.000000e+00> : vector<8x16xf32>
    %44 = tpu.matmul %41, %42, %cst_42 {dimension_numbers = #tpu.dot_dimension_numbers<[1], [1], [0], [0], [0, 0, 1, 0], [], []>} : vector<8x8xbf16>, vector<16x8xbf16>, vector<8x16xf32> -> vector<8x16xf32>
    %45 = vector.broadcast %10 : vector<1x16xf32> to vector<8x16xf32>
    %46 = arith.addf %44, %45 : vector<8x16xf32>
    %cst_43 = arith.constant dense<0xFF800000> : vector<8xf32>
    %47 = vector.multi_reduction <maximumf>, %46, %cst_43 [1] : vector<8x16xf32> to vector<8xf32>
    %48 = vector.shape_cast %47 : vector<8xf32> to vector<8x1xf32>
    %49 = vector.broadcast %48 : vector<8x1xf32> to vector<8x16xf32>
    %50 = arith.subf %46, %49 : vector<8x16xf32>
    %51 = math.exp %50 : vector<8x16xf32>
    %cst_44 = arith.constant dense<0.000000e+00> : vector<8xf32>
    %52 = vector.multi_reduction <add>, %51, %cst_44 [1] : vector<8x16xf32> to vector<8xf32>
    %53 = vector.shape_cast %52 : vector<8xf32> to vector<8x1xf32>
    %54 = tpu.reciprocal %53 : vector<8x1xf32> -> vector<8x1xf32>
    %55 = vector.broadcast %54 : vector<8x1xf32> to vector<8x16xf32>
    %56 = arith.mulf %51, %55 : vector<8x16xf32>
    %57 = arith.truncf %56 : vector<8x16xf32> to vector<8x16xbf16>
    %cst_45 = arith.constant dense<0.000000e+00> : vector<8x8xf32>
    %58 = tpu.matmul %57, %43, %cst_45 {dimension_numbers = #tpu.dot_dimension_numbers<[1], [0], [0], [1], [0, 0, 1, 1], [], []>} : vector<8x16xbf16>, vector<16x8xbf16>, vector<8x8xf32> -> vector<8x8xf32>
    %59 = arith.truncf %58 : vector<8x8xf32> to vector<8x8xbf16>
    %c0_46 = arith.constant 0 : index
    %c0_47 = arith.constant 0 : index
    %60 = vector.load %arg24[%c0_46, %c0_47] : memref<8x32xbf16, #tpu.memory_space<vmem>>, vector<8x8xbf16>
    tpu.vector_store %arg24[%c0_46, %c0_47], %59 {strides = array<i32>} : memref<8x32xbf16, #tpu.memory_space<vmem>>, vector<8x8xbf16>,
    %c0_48 = arith.constant 0 : index
    %c8 = arith.constant 8 : index
    %61 = vector.load %arg21[%c0_48, %c8] : memref<8x32xbf16, #tpu.memory_space<vmem>>, vector<8x8xbf16>
    %c0_49 = arith.constant 0 : index
    %c8_50 = arith.constant 8 : index
    %62 = vector.load %arg22[%c0_49, %c8_50] : memref<16x32xbf16, #tpu.memory_space<vmem>>, vector<16x8xbf16>
    %c0_51 = arith.constant 0 : index
    %c8_52 = arith.constant 8 : index
    %63 = vector.load %arg23[%c0_51, %c8_52] : memref<16x32xbf16, #tpu.memory_space<vmem>>, vector<16x8xbf16>
    %cst_53 = arith.constant dense<0.000000e+00> : vector<8x16xf32>
    %64 = tpu.matmul %61, %62, %cst_53 {dimension_numbers = #tpu.dot_dimension_numbers<[1], [1], [0], [0], [0, 0, 1, 0], [], []>} : vector<8x8xbf16>, vector<16x8xbf16>, vector<8x16xf32> -> vector<8x16xf32>
    %65 = vector.broadcast %10 : vector<1x16xf32> to vector<8x16xf32>
    %66 = arith.addf %64, %65 : vector<8x16xf32>
    %cst_54 = arith.constant dense<0xFF800000> : vector<8xf32>
    %67 = vector.multi_reduction <maximumf>, %66, %cst_54 [1] : vector<8x16xf32> to vector<8xf32>
    %68 = vector.shape_cast %67 : vector<8xf32> to vector<8x1xf32>
    %69 = vector.broadcast %68 : vector<8x1xf32> to vector<8x16xf32>
    %70 = arith.subf %66, %69 : vector<8x16xf32>
    %71 = math.exp %70 : vector<8x16xf32>
    %cst_55 = arith.constant dense<0.000000e+00> : vector<8xf32>
    %72 = vector.multi_reduction <add>, %71, %cst_55 [1] : vector<8x16xf32> to vector<8xf32>
    %73 = vector.shape_cast %72 : vector<8xf32> to vector<8x1xf32>
    %74 = tpu.reciprocal %73 : vector<8x1xf32> -> vector<8x1xf32>
    %75 = vector.broadcast %74 : vector<8x1xf32> to vector<8x16xf32>
    %76 = arith.mulf %71, %75 : vector<8x16xf32>
    %77 = arith.truncf %76 : vector<8x16xf32> to vector<8x16xbf16>
    %cst_56 = arith.constant dense<0.000000e+00> : vector<8x8xf32>
    %78 = tpu.matmul %77, %63, %cst_56 {dimension_numbers = #tpu.dot_dimension_numbers<[1], [0], [0], [1], [0, 0, 1, 1], [], []>} : vector<8x16xbf16>, vector<16x8xbf16>, vector<8x8xf32> -> vector<8x8xf32>
    %79 = arith.truncf %78 : vector<8x8xf32> to vector<8x8xbf16>
    %c0_57 = arith.constant 0 : index
    %c8_58 = arith.constant 8 : index
    %80 = vector.load %arg24[%c0_57, %c8_58] : memref<8x32xbf16, #tpu.memory_space<vmem>>, vector<8x8xbf16>
    tpu.vector_store %arg24[%c0_57, %c8_58], %79 {strides = array<i32>} : memref<8x32xbf16, #tpu.memory_space<vmem>>, vector<8x8xbf16>,
    %c0_59 = arith.constant 0 : index
    %c16 = arith.constant 16 : index
    %81 = vector.load %arg21[%c0_59, %c16] : memref<8x32xbf16, #tpu.memory_space<vmem>>, vector<8x8xbf16>
    %c0_60 = arith.constant 0 : index
    %c16_61 = arith.constant 16 : index
    %82 = vector.load %arg22[%c0_60, %c16_61] : memref<16x32xbf16, #tpu.memory_space<vmem>>, vector<16x8xbf16>
    %c0_62 = arith.constant 0 : index
    %c16_63 = arith.constant 16 : index
    %83 = vector.load %arg23[%c0_62, %c16_63] : memref<16x32xbf16, #tpu.memory_space<vmem>>, vector<16x8xbf16>
    %cst_64 = arith.constant dense<0.000000e+00> : vector<8x16xf32>
    %84 = tpu.matmul %81, %82, %cst_64 {dimension_numbers = #tpu.dot_dimension_numbers<[1], [1], [0], [0], [0, 0, 1, 0], [], []>} : vector<8x8xbf16>, vector<16x8xbf16>, vector<8x16xf32> -> vector<8x16xf32>
    %85 = vector.broadcast %10 : vector<1x16xf32> to vector<8x16xf32>
    %86 = arith.addf %84, %85 : vector<8x16xf32>
    %cst_65 = arith.constant dense<0xFF800000> : vector<8xf32>
    %87 = vector.multi_reduction <maximumf>, %86, %cst_65 [1] : vector<8x16xf32> to vector<8xf32>
    %88 = vector.shape_cast %87 : vector<8xf32> to vector<8x1xf32>
    %89 = vector.broadcast %88 : vector<8x1xf32> to vector<8x16xf32>
    %90 = arith.subf %86, %89 : vector<8x16xf32>
    %91 = math.exp %90 : vector<8x16xf32>
    %cst_66 = arith.constant dense<0.000000e+00> : vector<8xf32>
    %92 = vector.multi_reduction <add>, %91, %cst_66 [1] : vector<8x16xf32> to vector<8xf32>
    %93 = vector.shape_cast %92 : vector<8xf32> to vector<8x1xf32>
    %94 = tpu.reciprocal %93 : vector<8x1xf32> -> vector<8x1xf32>
    %95 = vector.broadcast %94 : vector<8x1xf32> to vector<8x16xf32>
    %96 = arith.mulf %91, %95 : vector<8x16xf32>
    %97 = arith.truncf %96 : vector<8x16xf32> to vector<8x16xbf16>
    %cst_67 = arith.constant dense<0.000000e+00> : vector<8x8xf32>
    %98 = tpu.matmul %97, %83, %cst_67 {dimension_numbers = #tpu.dot_dimension_numbers<[1], [0], [0], [1], [0, 0, 1, 1], [], []>} : vector<8x16xbf16>, vector<16x8xbf16>, vector<8x8xf32> -> vector<8x8xf32>
    %99 = arith.truncf %98 : vector<8x8xf32> to vector<8x8xbf16>
    %c0_68 = arith.constant 0 : index
    %c16_69 = arith.constant 16 : index
    %100 = vector.load %arg24[%c0_68, %c16_69] : memref<8x32xbf16, #tpu.memory_space<vmem>>, vector<8x8xbf16>
    tpu.vector_store %arg24[%c0_68, %c16_69], %99 {strides = array<i32>} : memref<8x32xbf16, #tpu.memory_space<vmem>>, vector<8x8xbf16>,
    %c0_70 = arith.constant 0 : index
    %c24 = arith.constant 24 : index
    %101 = vector.load %arg21[%c0_70, %c24] : memref<8x32xbf16, #tpu.memory_space<vmem>>, vector<8x8xbf16>
    %c0_71 = arith.constant 0 : index
    %c24_72 = arith.constant 24 : index
    %102 = vector.load %arg22[%c0_71, %c24_72] : memref<16x32xbf16, #tpu.memory_space<vmem>>, vector<16x8xbf16>
    %c0_73 = arith.constant 0 : index
    %c24_74 = arith.constant 24 : index
    %103 = vector.load %arg23[%c0_73, %c24_74] : memref<16x32xbf16, #tpu.memory_space<vmem>>, vector<16x8xbf16>
    %cst_75 = arith.constant dense<0.000000e+00> : vector<8x16xf32>
    %104 = tpu.matmul %101, %102, %cst_75 {dimension_numbers = #tpu.dot_dimension_numbers<[1], [1], [0], [0], [0, 0, 1, 0], [], []>} : vector<8x8xbf16>, vector<16x8xbf16>, vector<8x16xf32> -> vector<8x16xf32>
    %105 = vector.broadcast %10 : vector<1x16xf32> to vector<8x16xf32>
    %106 = arith.addf %104, %105 : vector<8x16xf32>
    %cst_76 = arith.constant dense<0xFF800000> : vector<8xf32>
    %107 = vector.multi_reduction <maximumf>, %106, %cst_76 [1] : vector<8x16xf32> to vector<8xf32>
    %108 = vector.shape_cast %107 : vector<8xf32> to vector<8x1xf32>
    %109 = vector.broadcast %108 : vector<8x1xf32> to vector<8x16xf32>
    %110 = arith.subf %106, %109 : vector<8x16xf32>
    %111 = math.exp %110 : vector<8x16xf32>
    %cst_77 = arith.constant dense<0.000000e+00> : vector<8xf32>
    %112 = vector.multi_reduction <add>, %111, %cst_77 [1] : vector<8x16xf32> to vector<8xf32>
    %113 = vector.shape_cast %112 : vector<8xf32> to vector<8x1xf32>
    %114 = tpu.reciprocal %113 : vector<8x1xf32> -> vector<8x1xf32>
    %115 = vector.broadcast %114 : vector<8x1xf32> to vector<8x16xf32>
    %116 = arith.mulf %111, %115 : vector<8x16xf32>
    %117 = arith.truncf %116 : vector<8x16xf32> to vector<8x16xbf16>
    %cst_78 = arith.constant dense<0.000000e+00> : vector<8x8xf32>
    %118 = tpu.matmul %117, %103, %cst_78 {dimension_numbers = #tpu.dot_dimension_numbers<[1], [0], [0], [1], [0, 0, 1, 1], [], []>} : vector<8x16xbf16>, vector<16x8xbf16>, vector<8x8xf32> -> vector<8x8xf32>
    %119 = arith.truncf %118 : vector<8x8xf32> to vector<8x8xbf16>
    %c0_79 = arith.constant 0 : index
    %c24_80 = arith.constant 24 : index
    %120 = vector.load %arg24[%c0_79, %c24_80] : memref<8x32xbf16, #tpu.memory_space<vmem>>, vector<8x8xbf16>
    tpu.vector_store %arg24[%c0_79, %c24_80], %119 {strides = array<i32>} : memref<8x32xbf16, #tpu.memory_space<vmem>>, vector<8x8xbf16>,
    %c0_81 = arith.constant 0 : index
    %c0_82 = arith.constant 0 : index
    %121 = vector.load %arg20[%c0_81, %c0_82] : memref<8x32xf32, #tpu.memory_space<vmem>>, vector<8x32xf32>
    %c0_83 = arith.constant 0 : index
    %c0_84 = arith.constant 0 : index
    %122 = vector.load %arg24[%c0_83, %c0_84] : memref<8x32xbf16, #tpu.memory_space<vmem>>, vector<8x32xbf16>
    %c0_85 = arith.constant 0 : index
    %c0_86 = arith.constant 0 : index
    %c0_87 = arith.constant 0 : index
    %123 = vector.load %arg12[%c0_85, %c0_86, %c0_87] : memref<1x32x32xbf16, #tpu.memory_space<vmem>>, vector<1x32x32xbf16>
    %124 = vector.shape_cast %123 : vector<1x32x32xbf16> to vector<32x32xbf16>
    %cst_88 = arith.constant dense<0.000000e+00> : vector<8x32xf32>
    %125 = tpu.matmul %122, %124, %cst_88 {dimension_numbers = #tpu.dot_dimension_numbers<[1], [0], [0], [1], [0, 0, 1, 1], [], []>} : vector<8x32xbf16>, vector<32x32xbf16>, vector<8x32xf32> -> vector<8x32xf32>
    %126 = arith.addf %121, %125 : vector<8x32xf32>
    %c0_89 = arith.constant 0 : index
    %c0_90 = arith.constant 0 : index
    %127 = vector.load %arg20[%c0_89, %c0_90] : memref<8x32xf32, #tpu.memory_space<vmem>>, vector<8x32xf32>
    tpu.vector_store %arg20[%c0_89, %c0_90], %126 {strides = array<i32>} : memref<8x32xf32, #tpu.memory_space<vmem>>, vector<8x32xf32>,
    %c0_i32_91 = arith.constant 0 : i32
    %128 = arith.cmpi eq, %arg2, %c0_i32_91 : i32
    %129 = arith.extui %128 : i1 to i32
    %c0_i32_92 = arith.constant 0 : i32
    %130 = arith.cmpi ne, %129, %c0_i32_92 : i32
    scf.if %130 {
      %c0_93 = arith.constant 0 : index
      %c0_94 = arith.constant 0 : index
      %131 = vector.load %arg17[%c0_93, %c0_94] : memref<6x32xf32, #tpu.memory_space<vmem>>, vector<6x32xf32>
      %132 = vector.extract_strided_slice %131 {offsets = [0, 0], sizes = [1, 32], strides = [1, 1]} : vector<6x32xf32> to vector<1x32xf32>
      %133 = vector.extract_strided_slice %131 {offsets = [1, 0], sizes = [1, 32], strides = [1, 1]} : vector<6x32xf32> to vector<1x32xf32>
      %134 = vector.extract_strided_slice %131 {offsets = [2, 0], sizes = [1, 32], strides = [1, 1]} : vector<6x32xf32> to vector<1x32xf32>
      %135 = vector.extract_strided_slice %131 {offsets = [3, 0], sizes = [1, 32], strides = [1, 1]} : vector<6x32xf32> to vector<1x32xf32>
      %136 = vector.extract_strided_slice %131 {offsets = [4, 0], sizes = [1, 32], strides = [1, 1]} : vector<6x32xf32> to vector<1x32xf32>
      %137 = vector.extract_strided_slice %131 {offsets = [5, 0], sizes = [1, 32], strides = [1, 1]} : vector<6x32xf32> to vector<1x32xf32>
      %c0_95 = arith.constant 0 : index
      %c0_96 = arith.constant 0 : index
      %c0_97 = arith.constant 0 : index
      %138 = vector.load %arg3[%c0_95, %c0_96, %c0_97] : memref<1x8x32xf32, #tpu.memory_space<vmem>>, vector<1x8x32xf32>
      %139 = vector.shape_cast %138 : vector<1x8x32xf32> to vector<8x32xf32>
      %c0_98 = arith.constant 0 : index
      %c0_99 = arith.constant 0 : index
      %140 = vector.load %arg20[%c0_98, %c0_99] : memref<8x32xf32, #tpu.memory_space<vmem>>, vector<8x32xf32>
      %141 = vector.broadcast %132 : vector<1x32xf32> to vector<8x32xf32>
      %142 = arith.addf %140, %141 : vector<8x32xf32>
      %143 = arith.addf %142, %139 : vector<8x32xf32>
      %cst_100 = arith.constant dense<0.000000e+00> : vector<8xf32>
      %144 = vector.multi_reduction <add>, %143, %cst_100 [1] : vector<8x32xf32> to vector<8xf32>
      %145 = vector.shape_cast %144 : vector<8xf32> to vector<8x1xf32>
      %cst_101 = arith.constant 3.200000e+01 : f32
      %146 = vector.broadcast %cst_101 : f32 to vector<8x1xf32>
      %147 = arith.divf %145, %146 : vector<8x1xf32>
      %148 = vector.broadcast %147 : vector<8x1xf32> to vector<8x32xf32>
      %149 = arith.subf %143, %148 : vector<8x32xf32>
      %150 = arith.mulf %149, %149 : vector<8x32xf32>
      %cst_102 = arith.constant dense<0.000000e+00> : vector<8xf32>
      %151 = vector.multi_reduction <add>, %150, %cst_102 [1] : vector<8x32xf32> to vector<8xf32>
      %152 = vector.shape_cast %151 : vector<8xf32> to vector<8x1xf32>
      %cst_103 = arith.constant 3.200000e+01 : f32
      %153 = vector.broadcast %cst_103 : f32 to vector<8x1xf32>
      %154 = arith.divf %152, %153 : vector<8x1xf32>
      %155 = vector.broadcast %147 : vector<8x1xf32> to vector<8x32xf32>
      %156 = arith.subf %143, %155 : vector<8x32xf32>
      %cst_104 = arith.constant 9.99999996E-13 : f32
      %157 = vector.broadcast %cst_104 : f32 to vector<8x1xf32>
      %158 = arith.addf %154, %157 : vector<8x1xf32>
      %159 = math.rsqrt %158 : vector<8x1xf32>
      %160 = vector.broadcast %159 : vector<8x1xf32> to vector<8x32xf32>
      %161 = arith.mulf %156, %160 : vector<8x32xf32>
      %162 = vector.broadcast %133 : vector<1x32xf32> to vector<8x32xf32>
      %163 = arith.mulf %161, %162 : vector<8x32xf32>
      %164 = vector.broadcast %134 : vector<1x32xf32> to vector<8x32xf32>
      %165 = arith.addf %163, %164 : vector<8x32xf32>
      %166 = arith.truncf %165 : vector<8x32xf32> to vector<8x32xbf16>
      %c0_105 = arith.constant 0 : index
      %c0_106 = arith.constant 0 : index
      %167 = vector.load %arg14[%c0_105, %c0_106] : memref<32x128xbf16, #tpu.memory_space<vmem>>, vector<32x128xbf16>
      %cst_107 = arith.constant dense<0.000000e+00> : vector<8x128xf32>
      %168 = tpu.matmul %166, %167, %cst_107 {dimension_numbers = #tpu.dot_dimension_numbers<[1], [0], [0], [1], [0, 0, 1, 1], [], []>} : vector<8x32xbf16>, vector<32x128xbf16>, vector<8x128xf32> -> vector<8x128xf32>
      %c0_108 = arith.constant 0 : index
      %c0_109 = arith.constant 0 : index
      %169 = vector.load %arg15[%c0_108, %c0_109] : memref<48x128xbf16, #tpu.memory_space<vmem>>, vector<48x128xbf16>
      %cst_110 = arith.constant dense<0.000000e+00> : vector<8x128xf32>
      %170 = tpu.matmul %6, %169, %cst_110 {dimension_numbers = #tpu.dot_dimension_numbers<[1], [0], [0], [1], [0, 0, 1, 1], [], []>} : vector<8x48xbf16>, vector<48x128xbf16>, vector<8x128xf32> -> vector<8x128xf32>
      %171 = arith.addf %168, %170 : vector<8x128xf32>
      %c0_111 = arith.constant 0 : index
      %c0_112 = arith.constant 0 : index
      %172 = vector.load %arg18[%c0_111, %c0_112] : memref<1x128xf32, #tpu.memory_space<vmem>>, vector<1x128xf32>
      %173 = vector.broadcast %172 : vector<1x128xf32> to vector<8x128xf32>
      %174 = arith.addf %171, %173 : vector<8x128xf32>
      %cst_113 = arith.constant 5.000000e-01 : f32
      %175 = vector.broadcast %cst_113 : f32 to vector<8x128xf32>
      %176 = arith.mulf %175, %174 : vector<8x128xf32>
      %cst_114 = arith.constant 4.471500e-02 : f32
      %177 = vector.broadcast %cst_114 : f32 to vector<8x128xf32>
      %178 = arith.mulf %177, %174 : vector<8x128xf32>
      %179 = arith.mulf %178, %174 : vector<8x128xf32>
      %180 = arith.mulf %179, %174 : vector<8x128xf32>
      %181 = arith.addf %174, %180 : vector<8x128xf32>
      %cst_115 = arith.constant 0.797884583 : f32
      %182 = vector.broadcast %cst_115 : f32 to vector<8x128xf32>
      %183 = arith.mulf %182, %181 : vector<8x128xf32>
      %184 = math.tanh %183 : vector<8x128xf32>
      %cst_116 = arith.constant 1.000000e+00 : f32
      %185 = vector.broadcast %cst_116 : f32 to vector<8x128xf32>
      %186 = arith.addf %185, %184 : vector<8x128xf32>
      %187 = arith.mulf %176, %186 : vector<8x128xf32>
      %188 = arith.truncf %187 : vector<8x128xf32> to vector<8x128xbf16>
      %c0_117 = arith.constant 0 : index
      %c0_118 = arith.constant 0 : index
      %189 = vector.load %arg16[%c0_117, %c0_118] : memref<128x32xbf16, #tpu.memory_space<vmem>>, vector<128x32xbf16>
      %cst_119 = arith.constant dense<0.000000e+00> : vector<8x32xf32>
      %190 = tpu.matmul %188, %189, %cst_119 {dimension_numbers = #tpu.dot_dimension_numbers<[1], [0], [0], [1], [0, 0, 1, 1], [], []>} : vector<8x128xbf16>, vector<128x32xbf16>, vector<8x32xf32> -> vector<8x32xf32>
      %191 = vector.broadcast %135 : vector<1x32xf32> to vector<8x32xf32>
      %192 = arith.addf %190, %191 : vector<8x32xf32>
      %193 = arith.addf %192, %165 : vector<8x32xf32>
      %cst_120 = arith.constant dense<0.000000e+00> : vector<8xf32>
      %194 = vector.multi_reduction <add>, %193, %cst_120 [1] : vector<8x32xf32> to vector<8xf32>
      %195 = vector.shape_cast %194 : vector<8xf32> to vector<8x1xf32>
      %cst_121 = arith.constant 3.200000e+01 : f32
      %196 = vector.broadcast %cst_121 : f32 to vector<8x1xf32>
      %197 = arith.divf %195, %196 : vector<8x1xf32>
      %198 = vector.broadcast %197 : vector<8x1xf32> to vector<8x32xf32>
      %199 = arith.subf %193, %198 : vector<8x32xf32>
      %200 = arith.mulf %199, %199 : vector<8x32xf32>
      %cst_122 = arith.constant dense<0.000000e+00> : vector<8xf32>
      %201 = vector.multi_reduction <add>, %200, %cst_122 [1] : vector<8x32xf32> to vector<8xf32>
      %202 = vector.shape_cast %201 : vector<8xf32> to vector<8x1xf32>
      %cst_123 = arith.constant 3.200000e+01 : f32
      %203 = vector.broadcast %cst_123 : f32 to vector<8x1xf32>
      %204 = arith.divf %202, %203 : vector<8x1xf32>
      %205 = vector.broadcast %197 : vector<8x1xf32> to vector<8x32xf32>
      %206 = arith.subf %193, %205 : vector<8x32xf32>
      %cst_124 = arith.constant 9.99999996E-13 : f32
      %207 = vector.broadcast %cst_124 : f32 to vector<8x1xf32>
      %208 = arith.addf %204, %207 : vector<8x1xf32>
      %209 = math.rsqrt %208 : vector<8x1xf32>
      %210 = vector.broadcast %209 : vector<8x1xf32> to vector<8x32xf32>
      %211 = arith.mulf %206, %210 : vector<8x32xf32>
      %212 = vector.broadcast %136 : vector<1x32xf32> to vector<8x32xf32>
      %213 = arith.mulf %211, %212 : vector<8x32xf32>
      %214 = vector.broadcast %137 : vector<1x32xf32> to vector<8x32xf32>
      %215 = arith.addf %213, %214 : vector<8x32xf32>
      %c0_125 = arith.constant 0 : index
      %c0_126 = arith.constant 0 : index
      %c0_127 = arith.constant 0 : index
      %216 = vector.load %arg19[%c0_125, %c0_126, %c0_127] : memref<1x8x32xf32, #tpu.memory_space<vmem>>, vector<1x8x32xf32>
      %217 = vector.shape_cast %216 : vector<1x8x32xf32> to vector<8x32xf32>
      %218 = vector.shape_cast %215 : vector<8x32xf32> to vector<1x8x32xf32>
      tpu.vector_store %arg19[%c0_125, %c0_126, %c0_127], %218 {strides = array<i32>} : memref<1x8x32xf32, #tpu.memory_space<vmem>>, vector<1x8x32xf32>,
    } else {
    }
    return
  }
  func.func @transform_0(%arg0: i32, %arg1: i32, %arg2: i32) -> (i32, i32, i32) {
    %c0_i32 = arith.constant 0 : i32
    %c0_i32_0 = arith.constant 0 : i32
    return %arg0, %arg1, %c0_i32 : i32, i32, i32
  }
  func.func @transform_1(%arg0: i32, %arg1: i32, %arg2: i32) -> (i32, i32, i32) {
    %c0_i32 = arith.constant 0 : i32
    %c0_i32_0 = arith.constant 0 : i32
    return %arg0, %arg1, %c0_i32 : i32, i32, i32
  }
  func.func @transform_2(%arg0: i32, %arg1: i32, %arg2: i32) -> (i32, i32, i32) {
    %c0_i32 = arith.constant 0 : i32
    %c0_i32_0 = arith.constant 0 : i32
    return %arg0, %arg1, %c0_i32 : i32, i32, i32
  }
  func.func @transform_3(%arg0: i32, %arg1: i32, %arg2: i32) -> (i32, i32, i32) {
    %c0_i32 = arith.constant 0 : i32
    %c0_i32_0 = arith.constant 0 : i32
    %c0_i32_1 = arith.constant 0 : i32
    return %arg0, %c0_i32, %c0_i32_0 : i32, i32, i32
  }
  func.func @transform_4(%arg0: i32, %arg1: i32, %arg2: i32) -> (i32, i32, i32) {
    %c0_i32 = arith.constant 0 : i32
    %c0_i32_0 = arith.constant 0 : i32
    %c0_i32_1 = arith.constant 0 : i32
    return %arg0, %c0_i32, %c0_i32_0 : i32, i32, i32
  }
  func.func @transform_5(%arg0: i32, %arg1: i32, %arg2: i32) -> (i32, i32, i32) {
    %c0_i32 = arith.constant 0 : i32
    %c0_i32_0 = arith.constant 0 : i32
    %c0_i32_1 = arith.constant 0 : i32
    return %arg2, %c0_i32, %c0_i32_0 : i32, i32, i32
  }
  func.func @transform_6(%arg0: i32, %arg1: i32, %arg2: i32) -> (i32, i32, i32) {
    %c0_i32 = arith.constant 0 : i32
    %c0_i32_0 = arith.constant 0 : i32
    %c0_i32_1 = arith.constant 0 : i32
    return %arg2, %c0_i32, %c0_i32_0 : i32, i32, i32
  }
  func.func @transform_7(%arg0: i32, %arg1: i32, %arg2: i32) -> (i32, i32, i32) {
    %c0_i32 = arith.constant 0 : i32
    %c0_i32_0 = arith.constant 0 : i32
    %c0_i32_1 = arith.constant 0 : i32
    return %arg2, %c0_i32, %c0_i32_0 : i32, i32, i32
  }
  func.func @transform_8(%arg0: i32, %arg1: i32, %arg2: i32) -> (i32, i32, i32) {
    %c0_i32 = arith.constant 0 : i32
    %c0_i32_0 = arith.constant 0 : i32
    %c0_i32_1 = arith.constant 0 : i32
    return %arg2, %c0_i32, %c0_i32_0 : i32, i32, i32
  }
  func.func @transform_9(%arg0: i32, %arg1: i32, %arg2: i32) -> (i32, i32, i32) {
    %c0_i32 = arith.constant 0 : i32
    %c0_i32_0 = arith.constant 0 : i32
    %c0_i32_1 = arith.constant 0 : i32
    return %arg2, %c0_i32, %c0_i32_0 : i32, i32, i32
  }
  func.func @transform_10(%arg0: i32, %arg1: i32, %arg2: i32) -> (i32, i32, i32) {
    %c0_i32 = arith.constant 0 : i32
    %c0_i32_0 = arith.constant 0 : i32
    %c0_i32_1 = arith.constant 0 : i32
    return %arg2, %c0_i32, %c0_i32_0 : i32, i32, i32
  }
  func.func @transform_11(%arg0: i32, %arg1: i32, %arg2: i32) -> (i32, i32) {
    %c0_i32 = arith.constant 0 : i32
    %c0_i32_0 = arith.constant 0 : i32
    %c0_i32_1 = arith.constant 0 : i32
    return %c0_i32, %c0_i32_0 : i32, i32
  }
  func.func @transform_12(%arg0: i32, %arg1: i32, %arg2: i32) -> (i32, i32) {
    %c0_i32 = arith.constant 0 : i32
    %c0_i32_0 = arith.constant 0 : i32
    %c0_i32_1 = arith.constant 0 : i32
    return %c0_i32, %c0_i32_0 : i32, i32
  }
  func.func @transform_13(%arg0: i32, %arg1: i32, %arg2: i32) -> (i32, i32) {
    %c0_i32 = arith.constant 0 : i32
    %c0_i32_0 = arith.constant 0 : i32
    %c0_i32_1 = arith.constant 0 : i32
    return %c0_i32, %c0_i32_0 : i32, i32
  }
  func.func @transform_14(%arg0: i32, %arg1: i32, %arg2: i32) -> (i32, i32) {
    %c0_i32 = arith.constant 0 : i32
    %c0_i32_0 = arith.constant 0 : i32
    %c0_i32_1 = arith.constant 0 : i32
    return %c0_i32, %c0_i32_0 : i32, i32
  }
  func.func @transform_15(%arg0: i32, %arg1: i32, %arg2: i32) -> (i32, i32) {
    %c0_i32 = arith.constant 0 : i32
    %c0_i32_0 = arith.constant 0 : i32
    %c0_i32_1 = arith.constant 0 : i32
    return %c0_i32, %c0_i32_0 : i32, i32
  }
  func.func @transform_16(%arg0: i32, %arg1: i32, %arg2: i32) -> (i32, i32, i32) {
    %c0_i32 = arith.constant 0 : i32
    %c0_i32_0 = arith.constant 0 : i32
    return %arg0, %arg1, %c0_i32 : i32, i32, i32
  }
}

</mosaic_0001>

<llo_original>
// kernel: tpu_custom_call.1
$region0: #{tpu_custom_call.1}
  #allocation0 [shape = 'u32[]', space=smem, size = 0x4, offset = 0x4, fixed_abs, tag = 'smem constant byte address 0x4 - core index']
  #allocation1 [shape = 'u32[144,128]{1,0:T(1,128)}', space=vmem, size = 0x12000, scoped, tag = 'internal scratch']
  #allocation2 [shape = 'f32[8,32]{1,0:T(8,128)}', space=vmem, size = 0x1000, scoped, tag = 'scratch operand']
  #allocation3 [shape = 'bf16[8,32]{1,0:T(8,128)(2,1)}', space=vmem, size = 0x800, scoped, tag = 'scratch operand']
  #allocation4 [shape = 'bf16[16,32]{1,0:T(16,128)(2,1)}', space=vmem, size = 0x1000, scoped, tag = 'scratch operand']
  #allocation5 [shape = 'bf16[16,32]{1,0:T(16,128)(2,1)}', space=vmem, size = 0x1000, scoped, tag = 'scratch operand']
  #allocation6 [shape = 'bf16[8,32]{1,0:T(8,128)(2,1)}', space=vmem, size = 0x800, scoped, tag = 'scratch operand']
  %s0 = inlined_call_operand.vmem [shape: f32[2,8,32], index: 0, kind: input, shape index: {}]
  %s1 = inlined_call_operand.vmem [shape: bf16[2,8,32], index: 1, kind: input, shape index: {}]
  %s2 = inlined_call_operand.vmem [shape: bf16[2,8,48], index: 2, kind: input, shape index: {}]
  %s3 = inlined_call_operand.vmem [shape: bf16[2,16,48], index: 3, kind: input, shape index: {}]
  %s4 = inlined_call_operand.vmem [shape: f32[2,1,16], index: 4, kind: input, shape index: {}]
  %s5 = inlined_call_operand.vmem [shape: bf16[1,32,32], index: 5, kind: input, shape index: {}]
  %s6 = inlined_call_operand.vmem [shape: bf16[1,48,32], index: 6, kind: input, shape index: {}]
  %s7 = inlined_call_operand.vmem [shape: bf16[1,48,32], index: 7, kind: input, shape index: {}]
  %s8 = inlined_call_operand.vmem [shape: bf16[1,48,32], index: 8, kind: input, shape index: {}]
  %s9 = inlined_call_operand.vmem [shape: bf16[1,32,32], index: 9, kind: input, shape index: {}]
  %s10 = inlined_call_operand.vmem [shape: f32[1,3,32], index: 10, kind: input, shape index: {}]
  %s11 = inlined_call_operand.vmem [shape: bf16[32,128], index: 11, kind: input, shape index: {}]
  %s12 = inlined_call_operand.vmem [shape: bf16[48,128], index: 12, kind: input, shape index: {}]
  %s13 = inlined_call_operand.vmem [shape: bf16[128,32], index: 13, kind: input, shape index: {}]
  %s14 = inlined_call_operand.vmem [shape: f32[6,32], index: 14, kind: input, shape index: {}]
  %s15 = inlined_call_operand.vmem [shape: f32[1,128], index: 15, kind: input, shape index: {}]
  %s16 = inlined_call_operand.hbm [shape: f32[2,8,32], index: 16, kind: output, shape index: {}]
  %s17 = sld [smem:[#allocation0]]
  $region105: #{tpu_custom_call.1} parent=0
    _
  %s19 = ssub.s32 1, %s17
  %s20 = scalar_select 0, %s19, %s17
  $region1: #{tpu_custom_call.1} parent=0
    #allocation7 [shape = 'u8[8192]{0}', space=vmem, size = 0x2000, scoped, tag = 'output window, operand 0']
    #allocation8 [shape = 's32[2]{0}', space=sflag, size = 0x8, scoped, tag = 'scoped memory for tpu_custom_call.1']
    %21 = vsyncpa [#allocation8], 0
    %s22 = scalar_lea.sflag [#allocation8], 1
    %23 = vsyncpa %s22, 0
    loop: start=0, step=1, limit=4
    $region2: #{tpu_custom_call.1} parent=1 // loop_pre_header
      _
    $region3: #{tpu_custom_call.1} parent=1 // loop_header
      %s25 = sphi 0, %s29
      %p26 = scmp.ge.s32.totalorder %s25, 4
      %s32 = sphi 0, %s51
      %s33 = sphi 0, %s47
      %s34 = sphi 0, %s43
      %s35 = sphi 0, %s32
      %s36 = sphi 0, %s33
      %s37 = sphi 0, %s34
      %s38 = sphi 0, %s35
      %s39 = sphi 0, %s36
      %s40 = sphi 0, %s37
      %s56 = sphi 0, %s58
      %s59 = sphi 0, %s56
      %s60 = sphi 0, %s59
      %s76 = sphi 0, %s60
      %s84 = sphi 0, %s86
      %s87 = sphi 0, %s84
      %s88 = sphi 0, %s87
      %s104 = sphi 0, %s88
      %s112 = sphi 0, %s114
      %s115 = sphi 0, %s112
      %s116 = sphi 0, %s115
      %s132 = sphi 0, %s116
      %s138 = sphi 0, %s140
      %s141 = sphi 0, %s138
      %s142 = sphi 0, %s141
      %s158 = sphi 0, %s142
      %s164 = sphi 0, %s166
      %s167 = sphi 0, %s164
      %s168 = sphi 0, %s167
      %s184 = sphi 0, %s168
      %s190 = sphi 0, %s192
      %s193 = sphi 0, %s190
      %s194 = sphi 0, %s193
      %s210 = sphi 0, %s194
      %s216 = sphi 0, %s218
      %s219 = sphi 0, %s216
      %s220 = sphi 0, %s219
      %s236 = sphi 0, %s220
      %s242 = sphi 0, %s244
      %s245 = sphi 0, %s242
      %s246 = sphi 0, %s245
      %s262 = sphi 0, %s246
      %s268 = sphi 0, %s270
      %s271 = sphi 0, %s268
      %s272 = sphi 0, %s271
      %s288 = sphi 0, %s272
      %s294 = sphi 0, %s296
      %s297 = sphi 0, %s294
      %s298 = sphi 0, %s297
      %s314 = sphi 0, %s298
      %s320 = sphi 0, %s322
      %s323 = sphi 0, %s320
      %s324 = sphi 0, %s323
      %s340 = sphi 0, %s324
      %s344 = sphi 0, %s344
      %s346 = sphi 0, %s344
      %s347 = sphi 0, %s346
      %s361 = sphi 0, %s347
      %s365 = sphi 0, %s365
      %s367 = sphi 0, %s365
      %s368 = sphi 0, %s367
      %s382 = sphi 0, %s368
      %s386 = sphi 0, %s386
      %s388 = sphi 0, %s386
      %s389 = sphi 0, %s388
      %s403 = sphi 0, %s389
      %s407 = sphi 0, %s407
      %s409 = sphi 0, %s407
      %s410 = sphi 0, %s409
      %s424 = sphi 0, %s410
      %s428 = sphi 0, %s428
      %s430 = sphi 0, %s428
      %s431 = sphi 0, %s430
      %s445 = sphi 0, %s431
      %s453 = sphi 0, %s455
      %s456 = sphi 0, %s453
      %s457 = sphi 0, %s456
      %s473 = sphi 0, %s457
    $region4: #{tpu_custom_call.1} parent=1 // loop_header_branch
      %28 = sbr.rel (%p26) target = $region8
    $region5: #{tpu_custom_call.1} parent=1 // loop_body
      %s30 = ssub.s32 %s25, 1
      %s31 = ssub.s32 %s25, 2
      %s41 = sadd.s32 1, %s34
      %p42 = scmp.ge.s32.totalorder %s41, 1
      %s43 = scalar_select %p42, 0, %s41
      %s44 = sadd.s32 1, %s33
      %s45 = scalar_select %p42, %s44, %s33
      %p46 = scmp.ge.s32.totalorder %s45, 1
      %s47 = scalar_select %p46, 0, %s45
      %s48 = sadd.s32 1, %s32
      %s49 = scalar_select %p46, %s48, %s32
      %p50 = scmp.ge.s32.totalorder %s49, 2
      %s51 = scalar_select %p50, 0, %s49
      %s52 = ssub.s32 %s32, %s51
      %s53 = ssub.s32 %s33, %s47
      %s54 = sor.u32 %s52, %s53
      %p55 = scmp.eq.s32.totalorder %s54, 0
      %s57 = sadd.s32 %s56, 1
      %s58 = scalar_select %p55, %s56, %s57
      %p61 = pneg %p55
      %p62 = scmp.eq.s32.totalorder %s25, 1
      %p63 = por %p61, %p62
      %p64 = scmp.ne.s32.totalorder %s56, %s59
      %p65 = scmp.eq.s32.totalorder %s25, 0
      %p66 = por %p64, %p65
      %p67 = scmp.ne.s32.totalorder %s56, %s59
      %p68 = scmp.eq.s32.totalorder %s30, 1
      %p69 = por %p67, %p68
      %p70 = scmp.ne.s32.totalorder %s59, %s60
      %p71 = scmp.eq.s32.totalorder %s30, 0
      %p72 = por %p70, %p71
      %p73 = scmp.ne.s32.totalorder %s59, %s60
      %p74 = scmp.eq.s32.totalorder %s31, 1
      %p75 = por %p73, %p74
      %p77 = scmp.ne.s32.totalorder %s60, %s76
      %p78 = scmp.eq.s32.totalorder %s31, 0
      %p79 = por %p77, %p78
      %s80 = ssub.s32 %s32, %s51
      %s81 = ssub.s32 %s33, %s47
      %s82 = sor.u32 %s80, %s81
      %p83 = scmp.eq.s32.totalorder %s82, 0
      %s85 = sadd.s32 %s84, 1
      %s86 = scalar_select %p83, %s84, %s85
      %p89 = pneg %p83
      %p90 = scmp.eq.s32.totalorder %s25, 1
      %p91 = por %p89, %p90
      %p92 = scmp.ne.s32.totalorder %s84, %s87
      %p93 = scmp.eq.s32.totalorder %s25, 0
      %p94 = por %p92, %p93
      %p95 = scmp.ne.s32.totalorder %s84, %s87
      %p96 = scmp.eq.s32.totalorder %s30, 1
      %p97 = por %p95, %p96
      %p98 = scmp.ne.s32.totalorder %s87, %s88
      %p99 = scmp.eq.s32.totalorder %s30, 0
      %p100 = por %p98, %p99
      %p101 = scmp.ne.s32.totalorder %s87, %s88
      %p102 = scmp.eq.s32.totalorder %s31, 1
      %p103 = por %p101, %p102
      %p105 = scmp.ne.s32.totalorder %s88, %s104
      %p106 = scmp.eq.s32.totalorder %s31, 0
      %p107 = por %p105, %p106
      %s108 = ssub.s32 %s32, %s51
      %s109 = ssub.s32 %s33, %s47
      %s110 = sor.u32 %s108, %s109
      %p111 = scmp.eq.s32.totalorder %s110, 0
      %s113 = sadd.s32 %s112, 1
      %s114 = scalar_select %p111, %s112, %s113
      %p117 = pneg %p111
      %p118 = scmp.eq.s32.totalorder %s25, 1
      %p119 = por %p117, %p118
      %p120 = scmp.ne.s32.totalorder %s112, %s115
      %p121 = scmp.eq.s32.totalorder %s25, 0
      %p122 = por %p120, %p121
      %p123 = scmp.ne.s32.totalorder %s112, %s115
      %p124 = scmp.eq.s32.totalorder %s30, 1
      %p125 = por %p123, %p124
      %p126 = scmp.ne.s32.totalorder %s115, %s116
      %p127 = scmp.eq.s32.totalorder %s30, 0
      %p128 = por %p126, %p127
      %p129 = scmp.ne.s32.totalorder %s115, %s116
      %p130 = scmp.eq.s32.totalorder %s31, 1
      %p131 = por %p129, %p130
      %p133 = scmp.ne.s32.totalorder %s116, %s132
      %p134 = scmp.eq.s32.totalorder %s31, 0
      %p135 = por %p133, %p134
      %s136 = ssub.s32 %s32, %s51
      %p137 = scmp.eq.s32.totalorder %s136, 0
      %s139 = sadd.s32 %s138, 1
      %s140 = scalar_select %p137, %s138, %s139
      %p143 = pneg %p137
      %p144 = scmp.eq.s32.totalorder %s25, 1
      %p145 = por %p143, %p144
      %p146 = scmp.ne.s32.totalorder %s138, %s141
      %p147 = scmp.eq.s32.totalorder %s25, 0
      %p148 = por %p146, %p147
      %p149 = scmp.ne.s32.totalorder %s138, %s141
      %p150 = scmp.eq.s32.totalorder %s30, 1
      %p151 = por %p149, %p150
      %p152 = scmp.ne.s32.totalorder %s141, %s142
      %p153 = scmp.eq.s32.totalorder %s30, 0
      %p154 = por %p152, %p153
      %p155 = scmp.ne.s32.totalorder %s141, %s142
      %p156 = scmp.eq.s32.totalorder %s31, 1
      %p157 = por %p155, %p156
      %p159 = scmp.ne.s32.totalorder %s142, %s158
      %p160 = scmp.eq.s32.totalorder %s31, 0
      %p161 = por %p159, %p160
      %s162 = ssub.s32 %s32, %s51
      %p163 = scmp.eq.s32.totalorder %s162, 0
      %s165 = sadd.s32 %s164, 1
      %s166 = scalar_select %p163, %s164, %s165
      %p169 = pneg %p163
      %p170 = scmp.eq.s32.totalorder %s25, 1
      %p171 = por %p169, %p170
      %p172 = scmp.ne.s32.totalorder %s164, %s167
      %p173 = scmp.eq.s32.totalorder %s25, 0
      %p174 = por %p172, %p173
      %p175 = scmp.ne.s32.totalorder %s164, %s167
      %p176 = scmp.eq.s32.totalorder %s30, 1
      %p177 = por %p175, %p176
      %p178 = scmp.ne.s32.totalorder %s167, %s168
      %p179 = scmp.eq.s32.totalorder %s30, 0
      %p180 = por %p178, %p179
      %p181 = scmp.ne.s32.totalorder %s167, %s168
      %p182 = scmp.eq.s32.totalorder %s31, 1
      %p183 = por %p181, %p182
      %p185 = scmp.ne.s32.totalorder %s168, %s184
      %p186 = scmp.eq.s32.totalorder %s31, 0
      %p187 = por %p185, %p186
      %s188 = ssub.s32 %s34, %s43
      %p189 = scmp.eq.s32.totalorder %s188, 0
      %s191 = sadd.s32 %s190, 1
      %s192 = scalar_select %p189, %s190, %s191
      %p195 = pneg %p189
      %p196 = scmp.eq.s32.totalorder %s25, 1
      %p197 = por %p195, %p196
      %p198 = scmp.ne.s32.totalorder %s190, %s193
      %p199 = scmp.eq.s32.totalorder %s25, 0
      %p200 = por %p198, %p199
      %p201 = scmp.ne.s32.totalorder %s190, %s193
      %p202 = scmp.eq.s32.totalorder %s30, 1
      %p203 = por %p201, %p202
      %p204 = scmp.ne.s32.totalorder %s193, %s194
      %p205 = scmp.eq.s32.totalorder %s30, 0
      %p206 = por %p204, %p205
      %p207 = scmp.ne.s32.totalorder %s193, %s194
      %p208 = scmp.eq.s32.totalorder %s31, 1
      %p209 = por %p207, %p208
      %p211 = scmp.ne.s32.totalorder %s194, %s210
      %p212 = scmp.eq.s32.totalorder %s31, 0
      %p213 = por %p211, %p212
      %s214 = ssub.s32 %s34, %s43
      %p215 = scmp.eq.s32.totalorder %s214, 0
      %s217 = sadd.s32 %s216, 1
      %s218 = scalar_select %p215, %s216, %s217
      %p221 = pneg %p215
      %p222 = scmp.eq.s32.totalorder %s25, 1
      %p223 = por %p221, %p222
      %p224 = scmp.ne.s32.totalorder %s216, %s219
      %p225 = scmp.eq.s32.totalorder %s25, 0
      %p226 = por %p224, %p225
      %p227 = scmp.ne.s32.totalorder %s216, %s219
      %p228 = scmp.eq.s32.totalorder %s30, 1
      %p229 = por %p227, %p228
      %p230 = scmp.ne.s32.totalorder %s219, %s220
      %p231 = scmp.eq.s32.totalorder %s30, 0
      %p232 = por %p230, %p231
      %p233 = scmp.ne.s32.totalorder %s219, %s220
      %p234 = scmp.eq.s32.totalorder %s31, 1
      %p235 = por %p233, %p234
      %p237 = scmp.ne.s32.totalorder %s220, %s236
      %p238 = scmp.eq.s32.totalorder %s31, 0
      %p239 = por %p237, %p238
      %s240 = ssub.s32 %s34, %s43
      %p241 = scmp.eq.s32.totalorder %s240, 0
      %s243 = sadd.s32 %s242, 1
      %s244 = scalar_select %p241, %s242, %s243
      %p247 = pneg %p241
      %p248 = scmp.eq.s32.totalorder %s25, 1
      %p249 = por %p247, %p248
      %p250 = scmp.ne.s32.totalorder %s242, %s245
      %p251 = scmp.eq.s32.totalorder %s25, 0
      %p252 = por %p250, %p251
      %p253 = scmp.ne.s32.totalorder %s242, %s245
      %p254 = scmp.eq.s32.totalorder %s30, 1
      %p255 = por %p253, %p254
      %p256 = scmp.ne.s32.totalorder %s245, %s246
      %p257 = scmp.eq.s32.totalorder %s30, 0
      %p258 = por %p256, %p257
      %p259 = scmp.ne.s32.totalorder %s245, %s246
      %p260 = scmp.eq.s32.totalorder %s31, 1
      %p261 = por %p259, %p260
      %p263 = scmp.ne.s32.totalorder %s246, %s262
      %p264 = scmp.eq.s32.totalorder %s31, 0
      %p265 = por %p263, %p264
      %s266 = ssub.s32 %s34, %s43
      %p267 = scmp.eq.s32.totalorder %s266, 0
      %s269 = sadd.s32 %s268, 1
      %s270 = scalar_select %p267, %s268, %s269
      %p273 = pneg %p267
      %p274 = scmp.eq.s32.totalorder %s25, 1
      %p275 = por %p273, %p274
      %p276 = scmp.ne.s32.totalorder %s268, %s271
      %p277 = scmp.eq.s32.totalorder %s25, 0
      %p278 = por %p276, %p277
      %p279 = scmp.ne.s32.totalorder %s268, %s271
      %p280 = scmp.eq.s32.totalorder %s30, 1
      %p281 = por %p279, %p280
      %p282 = scmp.ne.s32.totalorder %s271, %s272
      %p283 = scmp.eq.s32.totalorder %s30, 0
      %p284 = por %p282, %p283
      %p285 = scmp.ne.s32.totalorder %s271, %s272
      %p286 = scmp.eq.s32.totalorder %s31, 1
      %p287 = por %p285, %p286
      %p289 = scmp.ne.s32.totalorder %s272, %s288
      %p290 = scmp.eq.s32.totalorder %s31, 0
      %p291 = por %p289, %p290
      %s292 = ssub.s32 %s34, %s43
      %p293 = scmp.eq.s32.totalorder %s292, 0
      %s295 = sadd.s32 %s294, 1
      %s296 = scalar_select %p293, %s294, %s295
      %p299 = pneg %p293
      %p300 = scmp.eq.s32.totalorder %s25, 1
      %p301 = por %p299, %p300
      %p302 = scmp.ne.s32.totalorder %s294, %s297
      %p303 = scmp.eq.s32.totalorder %s25, 0
      %p304 = por %p302, %p303
      %p305 = scmp.ne.s32.totalorder %s294, %s297
      %p306 = scmp.eq.s32.totalorder %s30, 1
      %p307 = por %p305, %p306
      %p308 = scmp.ne.s32.totalorder %s297, %s298
      %p309 = scmp.eq.s32.totalorder %s30, 0
      %p310 = por %p308, %p309
      %p311 = scmp.ne.s32.totalorder %s297, %s298
      %p312 = scmp.eq.s32.totalorder %s31, 1
      %p313 = por %p311, %p312
      %p315 = scmp.ne.s32.totalorder %s298, %s314
      %p316 = scmp.eq.s32.totalorder %s31, 0
      %p317 = por %p315, %p316
      %s318 = ssub.s32 %s34, %s43
      %p319 = scmp.eq.s32.totalorder %s318, 0
      %s321 = sadd.s32 %s320, 1
      %s322 = scalar_select %p319, %s320, %s321
      %p325 = pneg %p319
      %p326 = scmp.eq.s32.totalorder %s25, 1
      %p327 = por %p325, %p326
      %p328 = scmp.ne.s32.totalorder %s320, %s323
      %p329 = scmp.eq.s32.totalorder %s25, 0
      %p330 = por %p328, %p329
      %p331 = scmp.ne.s32.totalorder %s320, %s323
      %p332 = scmp.eq.s32.totalorder %s30, 1
      %p333 = por %p331, %p332
      %p334 = scmp.ne.s32.totalorder %s323, %s324
      %p335 = scmp.eq.s32.totalorder %s30, 0
      %p336 = por %p334, %p335
      %p337 = scmp.ne.s32.totalorder %s323, %s324
      %p338 = scmp.eq.s32.totalorder %s31, 1
      %p339 = por %p337, %p338
      %p341 = scmp.ne.s32.totalorder %s324, %s340
      %p342 = scmp.eq.s32.totalorder %s31, 0
      %p343 = por %p341, %p342
      %s345 = sadd.s32 %s344, 1
      %p348 = scmp.eq.s32.totalorder %s25, 1
      %p349 = scmp.ne.s32.totalorder %s344, %s346
      %p350 = scmp.eq.s32.totalorder %s25, 0
      %p351 = por %p349, %p350
      %p352 = scmp.ne.s32.totalorder %s344, %s346
      %p353 = scmp.eq.s32.totalorder %s30, 1
      %p354 = por %p352, %p353
      %p355 = scmp.ne.s32.totalorder %s346, %s347
      %p356 = scmp.eq.s32.totalorder %s30, 0
      %p357 = por %p355, %p356
      %p358 = scmp.ne.s32.totalorder %s346, %s347
      %p359 = scmp.eq.s32.totalorder %s31, 1
      %p360 = por %p358, %p359
      %p362 = scmp.ne.s32.totalorder %s347, %s361
      %p363 = scmp.eq.s32.totalorder %s31, 0
      %p364 = por %p362, %p363
      %s366 = sadd.s32 %s365, 1
      %p369 = scmp.eq.s32.totalorder %s25, 1
      %p370 = scmp.ne.s32.totalorder %s365, %s367
      %p371 = scmp.eq.s32.totalorder %s25, 0
      %p372 = por %p370, %p371
      %p373 = scmp.ne.s32.totalorder %s365, %s367
      %p374 = scmp.eq.s32.totalorder %s30, 1
      %p375 = por %p373, %p374
      %p376 = scmp.ne.s32.totalorder %s367, %s368
      %p377 = scmp.eq.s32.totalorder %s30, 0
      %p378 = por %p376, %p377
      %p379 = scmp.ne.s32.totalorder %s367, %s368
      %p380 = scmp.eq.s32.totalorder %s31, 1
      %p381 = por %p379, %p380
      %p383 = scmp.ne.s32.totalorder %s368, %s382
      %p384 = scmp.eq.s32.totalorder %s31, 0
      %p385 = por %p383, %p384
      %s387 = sadd.s32 %s386, 1
      %p390 = scmp.eq.s32.totalorder %s25, 1
      %p391 = scmp.ne.s32.totalorder %s386, %s388
      %p392 = scmp.eq.s32.totalorder %s25, 0
      %p393 = por %p391, %p392
      %p394 = scmp.ne.s32.totalorder %s386, %s388
      %p395 = scmp.eq.s32.totalorder %s30, 1
      %p396 = por %p394, %p395
      %p397 = scmp.ne.s32.totalorder %s388, %s389
      %p398 = scmp.eq.s32.totalorder %s30, 0
      %p399 = por %p397, %p398
      %p400 = scmp.ne.s32.totalorder %s388, %s389
      %p401 = scmp.eq.s32.totalorder %s31, 1
      %p402 = por %p400, %p401
      %p404 = scmp.ne.s32.totalorder %s389, %s403
      %p405 = scmp.eq.s32.totalorder %s31, 0
      %p406 = por %p404, %p405
      %s408 = sadd.s32 %s407, 1
      %p411 = scmp.eq.s32.totalorder %s25, 1
      %p412 = scmp.ne.s32.totalorder %s407, %s409
      %p413 = scmp.eq.s32.totalorder %s25, 0
      %p414 = por %p412, %p413
      %p415 = scmp.ne.s32.totalorder %s407, %s409
      %p416 = scmp.eq.s32.totalorder %s30, 1
      %p417 = por %p415, %p416
      %p418 = scmp.ne.s32.totalorder %s409, %s410
      %p419 = scmp.eq.s32.totalorder %s30, 0
      %p420 = por %p418, %p419
      %p421 = scmp.ne.s32.totalorder %s409, %s410
      %p422 = scmp.eq.s32.totalorder %s31, 1
      %p423 = por %p421, %p422
      %p425 = scmp.ne.s32.totalorder %s410, %s424
      %p426 = scmp.eq.s32.totalorder %s31, 0
      %p427 = por %p425, %p426
      %s429 = sadd.s32 %s428, 1
      %p432 = scmp.eq.s32.totalorder %s25, 1
      %p433 = scmp.ne.s32.totalorder %s428, %s430
      %p434 = scmp.eq.s32.totalorder %s25, 0
      %p435 = por %p433, %p434
      %p436 = scmp.ne.s32.totalorder %s428, %s430
      %p437 = scmp.eq.s32.totalorder %s30, 1
      %p438 = por %p436, %p437
      %p439 = scmp.ne.s32.totalorder %s430, %s431
      %p440 = scmp.eq.s32.totalorder %s30, 0
      %p441 = por %p439, %p440
      %p442 = scmp.ne.s32.totalorder %s430, %s431
      %p443 = scmp.eq.s32.totalorder %s31, 1
      %p444 = por %p442, %p443
      %p446 = scmp.ne.s32.totalorder %s431, %s445
      %p447 = scmp.eq.s32.totalorder %s31, 0
      %p448 = por %p446, %p447
      %s449 = ssub.s32 %s32, %s51
      %s450 = ssub.s32 %s33, %s47
      %s451 = sor.u32 %s449, %s450
      %p452 = scmp.eq.s32.totalorder %s451, 0
      %s454 = sadd.s32 %s453, 1
      %s455 = scalar_select %p452, %s453, %s454
      %p458 = pneg %p452
      %p459 = scmp.eq.s32.totalorder %s25, 1
      %p460 = por %p458, %p459
      %p461 = scmp.ne.s32.totalorder %s453, %s456
      %p462 = scmp.eq.s32.totalorder %s25, 0
      %p463 = por %p461, %p462
      %p464 = scmp.ne.s32.totalorder %s453, %s456
      %p465 = scmp.eq.s32.totalorder %s30, 1
      %p466 = por %p464, %p465
      %p467 = scmp.ne.s32.totalorder %s456, %s457
      %p468 = scmp.eq.s32.totalorder %s30, 0
      %p469 = por %p467, %p468
      %p470 = scmp.ne.s32.totalorder %s456, %s457
      %p471 = scmp.eq.s32.totalorder %s31, 1
      %p472 = por %p470, %p471
      %p474 = scmp.ne.s32.totalorder %s457, %s473
      %p475 = scmp.eq.s32.totalorder %s31, 0
      %p476 = por %p474, %p475
      %p477 = scmp.le.s32.totalorder 1, %s25
      %p478 = scmp.lt.s32.totalorder %s25, 3
      %p479 = pnand %p477, %p478
      %p480 = pneg %p479
      // Predicated region
      $region9: #{tpu_custom_call.1} parent=5 // pred_check
        _
      $region10: #{tpu_custom_call.1} parent=5 // pred_check_branch
        %482 = sbr.rel (%p479) target = $region12
      $region11: #{tpu_custom_call.1} parent=5 // pred_region
        %s483 = ssub.s32 %s25, 1
        // Predicated region
        $region13: #{tpu_custom_call.1} parent=11 // pred_check
          %p484 = pneg %p206
        $region14: #{tpu_custom_call.1} parent=11 // pred_check_branch
          %486 = sbr.rel (%p484) target = $region16
        $region15: #{tpu_custom_call.1} parent=11 // pred_region
          %p487 = scmp.lt.s32.totalorder %s37, 0
          %s488 = scalar_select %p487, %s37, 0
          %s489 = smul.addr %s488, 4
          %s490 = smul.addr %s489, 4
          %s491 = scalar_lea.vmem %s5, %s490
        $region16: #{tpu_custom_call.1} parent=11 // pred_fallthru
          _
        // Predicated region
        $region17: #{tpu_custom_call.1} parent=11 // pred_check
          %p492 = pneg %p232
        $region18: #{tpu_custom_call.1} parent=11 // pred_check_branch
          %494 = sbr.rel (%p492) target = $region20
        $region19: #{tpu_custom_call.1} parent=11 // pred_region
          %p495 = scmp.lt.s32.totalorder %s37, 0
          %s496 = scalar_select %p495, %s37, 0
          %s497 = smul.addr %s496, 6
          %s498 = smul.addr %s497, 4
          %s499 = scalar_lea.vmem %s6, %s498
        $region20: #{tpu_custom_call.1} parent=11 // pred_fallthru
          _
        // Predicated region
        $region21: #{tpu_custom_call.1} parent=11 // pred_check
          %p500 = pneg %p258
        $region22: #{tpu_custom_call.1} parent=11 // pred_check_branch
          %502 = sbr.rel (%p500) target = $region24
        $region23: #{tpu_custom_call.1} parent=11 // pred_region
          %p503 = scmp.lt.s32.totalorder %s37, 0
          %s504 = scalar_select %p503, %s37, 0
          %s505 = smul.addr %s504, 6
          %s506 = smul.addr %s505, 4
          %s507 = scalar_lea.vmem %s7, %s506
        $region24: #{tpu_custom_call.1} parent=11 // pred_fallthru
          _
        // Predicated region
        $region25: #{tpu_custom_call.1} parent=11 // pred_check
          %p508 = pneg %p284
        $region26: #{tpu_custom_call.1} parent=11 // pred_check_branch
          %510 = sbr.rel (%p508) target = $region28
        $region27: #{tpu_custom_call.1} parent=11 // pred_region
          %p511 = scmp.lt.s32.totalorder %s37, 0
          %s512 = scalar_select %p511, %s37, 0
          %s513 = smul.addr %s512, 6
          %s514 = smul.addr %s513, 4
          %s515 = scalar_lea.vmem %s8, %s514
        $region28: #{tpu_custom_call.1} parent=11 // pred_fallthru
          _
        // Predicated region
        $region29: #{tpu_custom_call.1} parent=11 // pred_check
          %p516 = pneg %p310
        $region30: #{tpu_custom_call.1} parent=11 // pred_check_branch
          %518 = sbr.rel (%p516) target = $region32
        $region31: #{tpu_custom_call.1} parent=11 // pred_region
          %p519 = scmp.lt.s32.totalorder %s37, 0
          %s520 = scalar_select %p519, %s37, 0
          %s521 = smul.addr %s520, 4
          %s522 = smul.addr %s521, 4
          %s523 = scalar_lea.vmem %s9, %s522
        $region32: #{tpu_custom_call.1} parent=11 // pred_fallthru
          _
        // Predicated region
        $region33: #{tpu_custom_call.1} parent=11 // pred_check
          %p524 = pneg %p336
        $region34: #{tpu_custom_call.1} parent=11 // pred_check_branch
          %526 = sbr.rel (%p524) target = $region36
        $region35: #{tpu_custom_call.1} parent=11 // pred_region
          %p527 = scmp.lt.s32.totalorder %s37, 0
          %s528 = scalar_select %p527, %s37, 0
          %s529 = smul.addr %s528, 4
          %s530 = scalar_lea.vmem %s10, %s529
        $region36: #{tpu_custom_call.1} parent=11 // pred_fallthru
          _
        // Predicated region
        $region37: #{tpu_custom_call.1} parent=11 // pred_check
          %p531 = pneg %p357
        $region38: #{tpu_custom_call.1} parent=11 // pred_check_branch
          %533 = sbr.rel (%p531) target = $region40
        $region39: #{tpu_custom_call.1} parent=11 // pred_region
          _
        $region40: #{tpu_custom_call.1} parent=11 // pred_fallthru
          _
        // Predicated region
        $region41: #{tpu_custom_call.1} parent=11 // pred_check
          %p534 = pneg %p378
        $region42: #{tpu_custom_call.1} parent=11 // pred_check_branch
          %536 = sbr.rel (%p534) target = $region44
        $region43: #{tpu_custom_call.1} parent=11 // pred_region
          _
        $region44: #{tpu_custom_call.1} parent=11 // pred_fallthru
          _
        // Predicated region
        $region45: #{tpu_custom_call.1} parent=11 // pred_check
          %p537 = pneg %p399
        $region46: #{tpu_custom_call.1} parent=11 // pred_check_branch
          %539 = sbr.rel (%p537) target = $region48
        $region47: #{tpu_custom_call.1} parent=11 // pred_region
          _
        $region48: #{tpu_custom_call.1} parent=11 // pred_fallthru
          _
        // Predicated region
        $region49: #{tpu_custom_call.1} parent=11 // pred_check
          %p540 = pneg %p420
        $region50: #{tpu_custom_call.1} parent=11 // pred_check_branch
          %542 = sbr.rel (%p540) target = $region52
        $region51: #{tpu_custom_call.1} parent=11 // pred_region
          _
        $region52: #{tpu_custom_call.1} parent=11 // pred_fallthru
          _
        // Predicated region
        $region53: #{tpu_custom_call.1} parent=11 // pred_check
          %p543 = pneg %p441
        $region54: #{tpu_custom_call.1} parent=11 // pred_check_branch
          %545 = sbr.rel (%p543) target = $region56
        $region55: #{tpu_custom_call.1} parent=11 // pred_region
          _
        $region56: #{tpu_custom_call.1} parent=11 // pred_fallthru
          _
      $region12: #{tpu_custom_call.1} parent=5 // pred_fallthru
        _
      %p546 = scmp.lt.s32.totalorder %s25, 2
      // Predicated region
      $region57: #{tpu_custom_call.1} parent=5 // pred_check
        %p547 = pneg %p546
      $region58: #{tpu_custom_call.1} parent=5 // pred_check_branch
        %549 = sbr.rel (%p547) target = $region60
      $region59: #{tpu_custom_call.1} parent=5 // pred_region
        // Predicated region
        $region61: #{tpu_custom_call.1} parent=59 // pred_check
          %p550 = pneg %p66
        $region62: #{tpu_custom_call.1} parent=59 // pred_check_branch
          %552 = sbr.rel (%p550) target = $region64
        $region63: #{tpu_custom_call.1} parent=59 // pred_region
          %p553 = scmp.lt.s32.totalorder %s32, 1
          %s554 = scalar_select %p553, %s32, 1
          %p555 = scmp.lt.s32.totalorder %s33, 0
          %s556 = scalar_select %p555, %s33, 0
          %s557 = sadd.s32 %s556, %s554
          %s558 = smul.addr %s557, 8
          %s559 = scalar_lea.vmem %s0, %s558
        $region64: #{tpu_custom_call.1} parent=59 // pred_fallthru
          _
        // Predicated region
        $region65: #{tpu_custom_call.1} parent=59 // pred_check
          %p560 = pneg %p94
        $region66: #{tpu_custom_call.1} parent=59 // pred_check_branch
          %562 = sbr.rel (%p560) target = $region68
        $region67: #{tpu_custom_call.1} parent=59 // pred_region
          %p563 = scmp.lt.s32.totalorder %s32, 1
          %s564 = scalar_select %p563, %s32, 1
          %p565 = scmp.lt.s32.totalorder %s33, 0
          %s566 = scalar_select %p565, %s33, 0
          %s567 = sadd.s32 %s566, %s564
          %s568 = smul.addr %s567, 4
          %s569 = scalar_lea.vmem %s1, %s568
        $region68: #{tpu_custom_call.1} parent=59 // pred_fallthru
          _
        // Predicated region
        $region69: #{tpu_custom_call.1} parent=59 // pred_check
          %p570 = pneg %p122
        $region70: #{tpu_custom_call.1} parent=59 // pred_check_branch
          %572 = sbr.rel (%p570) target = $region72
        $region71: #{tpu_custom_call.1} parent=59 // pred_region
          %p573 = scmp.lt.s32.totalorder %s32, 1
          %s574 = scalar_select %p573, %s32, 1
          %p575 = scmp.lt.s32.totalorder %s33, 0
          %s576 = scalar_select %p575, %s33, 0
          %s577 = sadd.s32 %s576, %s574
          %s578 = smul.addr %s577, 4
          %s579 = scalar_lea.vmem %s2, %s578
        $region72: #{tpu_custom_call.1} parent=59 // pred_fallthru
          _
        // Predicated region
        $region73: #{tpu_custom_call.1} parent=59 // pred_check
          %p580 = pneg %p148
        $region74: #{tpu_custom_call.1} parent=59 // pred_check_branch
          %582 = sbr.rel (%p580) target = $region76
        $region75: #{tpu_custom_call.1} parent=59 // pred_region
          %p583 = scmp.lt.s32.totalorder %s32, 1
          %s584 = scalar_select %p583, %s32, 1
          %s585 = smul.addr %s584, 2
          %s586 = smul.addr %s585, 4
          %s587 = scalar_lea.vmem %s3, %s586
        $region76: #{tpu_custom_call.1} parent=59 // pred_fallthru
          _
        // Predicated region
        $region77: #{tpu_custom_call.1} parent=59 // pred_check
          %p588 = pneg %p174
        $region78: #{tpu_custom_call.1} parent=59 // pred_check_branch
          %590 = sbr.rel (%p588) target = $region80
        $region79: #{tpu_custom_call.1} parent=59 // pred_region
          %p591 = scmp.lt.s32.totalorder %s32, 1
          %s592 = scalar_select %p591, %s32, 1
          %s593 = scalar_lea.vmem %s4, %s592
        $region80: #{tpu_custom_call.1} parent=59 // pred_fallthru
          _
      $region60: #{tpu_custom_call.1} parent=5 // pred_fallthru
        _
      %p594 = scmp.le.s32.totalorder 1, %s25
      %p595 = scmp.lt.s32.totalorder %s25, 3
      %p596 = pnand %p594, %p595
      %p597 = pneg %p596
      // Predicated region
      $region81: #{tpu_custom_call.1} parent=5 // pred_check
        _
      $region82: #{tpu_custom_call.1} parent=5 // pred_check_branch
        %599 = sbr.rel (%p596) target = $region84
      $region83: #{tpu_custom_call.1} parent=5 // pred_region
        %s600 = ssub.s32 %s25, 1
        %p601 = scmp.lt.s32.totalorder %s35, 1
        %s602 = scalar_select %p601, %s35, 1
        %p603 = scmp.lt.s32.totalorder %s36, 0
        %s604 = scalar_select %p603, %s36, 0
        %s605 = sadd.s32 %s604, %s602
        %s606 = smul.addr %s605, 8
        %s607 = scalar_lea.vmem %s0, %s606
        %p608 = pneg %p72
        %p609 = pneg %p69
        %p610 = scmp.lt.s32.totalorder %s35, 1
        %s611 = scalar_select %p610, %s35, 1
        %p612 = scmp.lt.s32.totalorder %s36, 0
        %s613 = scalar_select %p612, %s36, 0
        %s614 = sadd.s32 %s613, %s611
        %s615 = smul.addr %s614, 4
        %s616 = scalar_lea.vmem %s1, %s615
        %p617 = pneg %p100
        %p618 = pneg %p97
        %p619 = scmp.lt.s32.totalorder %s35, 1
        %s620 = scalar_select %p619, %s35, 1
        %p621 = scmp.lt.s32.totalorder %s36, 0
        %s622 = scalar_select %p621, %s36, 0
        %s623 = sadd.s32 %s622, %s620
        %s624 = smul.addr %s623, 4
        %s625 = scalar_lea.vmem %s2, %s624
        %p626 = pneg %p128
        %p627 = pneg %p125
        %p628 = scmp.lt.s32.totalorder %s35, 1
        %s629 = scalar_select %p628, %s35, 1
        %s630 = smul.addr %s629, 2
        %s631 = smul.addr %s630, 4
        %s632 = scalar_lea.vmem %s3, %s631
        %p633 = pneg %p154
        %p634 = pneg %p151
        %p635 = scmp.lt.s32.totalorder %s35, 1
        %s636 = scalar_select %p635, %s35, 1
        %s637 = scalar_lea.vmem %s4, %s636
        %p638 = pneg %p180
        %p639 = pneg %p177
        %p640 = scmp.lt.s32.totalorder %s37, 0
        %s641 = scalar_select %p640, %s37, 0
        %s642 = smul.addr %s641, 4
        %s643 = smul.addr %s642, 4
        %s644 = scalar_lea.vmem %s5, %s643
        %p645 = pneg %p206
        %p646 = pneg %p203
        %p647 = scmp.lt.s32.totalorder %s37, 0
        %s648 = scalar_select %p647, %s37, 0
        %s649 = smul.addr %s648, 6
        %s650 = smul.addr %s649, 4
        %s651 = scalar_lea.vmem %s6, %s650
        %p652 = pneg %p232
        %p653 = pneg %p229
        %p654 = scmp.lt.s32.totalorder %s37, 0
        %s655 = scalar_select %p654, %s37, 0
        %s656 = smul.addr %s655, 6
        %s657 = smul.addr %s656, 4
        %s658 = scalar_lea.vmem %s7, %s657
        %p659 = pneg %p258
        %p660 = pneg %p255
        %p661 = scmp.lt.s32.totalorder %s37, 0
        %s662 = scalar_select %p661, %s37, 0
        %s663 = smul.addr %s662, 6
        %s664 = smul.addr %s663, 4
        %s665 = scalar_lea.vmem %s8, %s664
        %p666 = pneg %p284
        %p667 = pneg %p281
        %p668 = scmp.lt.s32.totalorder %s37, 0
        %s669 = scalar_select %p668, %s37, 0
        %s670 = smul.addr %s669, 4
        %s671 = smul.addr %s670, 4
        %s672 = scalar_lea.vmem %s9, %s671
        %p673 = pneg %p310
        %p674 = pneg %p307
        %p675 = scmp.lt.s32.totalorder %s37, 0
        %s676 = scalar_select %p675, %s37, 0
        %s677 = smul.addr %s676, 4
        %s678 = scalar_lea.vmem %s10, %s677
        %p679 = pneg %p336
        %p680 = pneg %p333
        %p681 = pneg %p357
        %p682 = pneg %p354
        %p683 = pneg %p378
        %p684 = pneg %p375
        %p685 = pneg %p399
        %p686 = pneg %p396
        %p687 = pneg %p420
        %p688 = pneg %p417
        %p689 = pneg %p441
        %p690 = pneg %p438
        %p691 = pneg %p469
        %p692 = pneg %p466
        %s693 = sand.u32 %s456, 1
        %s694 = scalar_lea.sflag [#allocation8], %s693
        %s695 = sand.u32 %s456, 1
        %s696 = smul.addr %s695, 8
        %s697 = scalar_lea.vmem [#allocation7], %s696
        %p698 = scmp.lt.s32.totalorder %s35, 1
        %s699 = scalar_select %p698, %s35, 1
        %p700 = scmp.lt.s32.totalorder %s36, 0
        %s701 = scalar_select %p700, %s36, 0
        %s702 = sadd.s32 %s701, %s699
        %s703 = smul.addr %s702, 8
        %s704 = scalar_lea.vmem %s0, %s703
        %p705 = scmp.lt.s32.totalorder %s35, 1
        %s706 = scalar_select %p705, %s35, 1
        %p707 = scmp.lt.s32.totalorder %s36, 0
        %s708 = scalar_select %p707, %s36, 0
        %s709 = sadd.s32 %s708, %s706
        %s710 = smul.addr %s709, 4
        %s711 = scalar_lea.vmem %s1, %s710
        %p712 = scmp.lt.s32.totalorder %s35, 1
        %s713 = scalar_select %p712, %s35, 1
        %p714 = scmp.lt.s32.totalorder %s36, 0
        %s715 = scalar_select %p714, %s36, 0
        %s716 = sadd.s32 %s715, %s713
        %s717 = smul.addr %s716, 4
        %s718 = scalar_lea.vmem %s2, %s717
        %p719 = scmp.lt.s32.totalorder %s35, 1
        %s720 = scalar_select %p719, %s35, 1
        %s721 = smul.addr %s720, 2
        %s722 = smul.addr %s721, 4
        %s723 = scalar_lea.vmem %s3, %s722
        %p724 = scmp.lt.s32.totalorder %s35, 1
        %s725 = scalar_select %p724, %s35, 1
        %s726 = scalar_lea.vmem %s4, %s725
        %p727 = scmp.lt.s32.totalorder %s37, 0
        %s728 = scalar_select %p727, %s37, 0
        %s729 = smul.addr %s728, 4
        %s730 = smul.addr %s729, 4
        %s731 = scalar_lea.vmem %s5, %s730
        %p732 = scmp.lt.s32.totalorder %s37, 0
        %s733 = scalar_select %p732, %s37, 0
        %s734 = smul.addr %s733, 6
        %s735 = smul.addr %s734, 4
        %s736 = scalar_lea.vmem %s6, %s735
        %p737 = scmp.lt.s32.totalorder %s37, 0
        %s738 = scalar_select %p737, %s37, 0
        %s739 = smul.addr %s738, 6
        %s740 = smul.addr %s739, 4
        %s741 = scalar_lea.vmem %s7, %s740
        %p742 = scmp.lt.s32.totalorder %s37, 0
        %s743 = scalar_select %p742, %s37, 0
        %s744 = smul.addr %s743, 6
        %s745 = smul.addr %s744, 4
        %s746 = scalar_lea.vmem %s8, %s745
        %p747 = scmp.lt.s32.totalorder %s37, 0
        %s748 = scalar_select %p747, %s37, 0
        %s749 = smul.addr %s748, 4
        %s750 = smul.addr %s749, 4
        %s751 = scalar_lea.vmem %s9, %s750
        %p752 = scmp.lt.s32.totalorder %s37, 0
        %s753 = scalar_select %p752, %s37, 0
        %s754 = smul.addr %s753, 4
        %s755 = scalar_lea.vmem %s10, %s754
        %p757 = scmp.eq.s32.totalorder %s37, 0
        // Predicated region
        $region85: #{tpu_custom_call.1} parent=83 // pred_check
          %p758 = pneg %p757
        $region86: #{tpu_custom_call.1} parent=83 // pred_check_branch
          %760 = sbr.rel (%p758) target = $region88
        $region87: #{tpu_custom_call.1} parent=83 // pred_region
          %vm761 = vcmask 261120
          %762 = vst.msk [vmem:[#allocation2] sm:$0xff] %vm761, 0.0
        $region88: #{tpu_custom_call.1} parent=83 // pred_fallthru
          _
        %v763 = vld [vmem:[%s711] sm:$0xf]
        %v764 = vld [vmem:[%s718] sm:$0xf]
        %v765 = vld [vmem:[%s723] sm:$0xf]
        %v766 = vld [vmem:[%s723 + $0x4] sm:$0xf]
        %v767 = vld [vmem:[%s726] sm:$0x1]
        %v768 = vld [vmem:[%s755] sm:$0x7]
        %v769 = vld [vmem:[%s731] sm:$0xf]
        %v770 = vld [vmem:[%s731 + $0x4] sm:$0xf]
        %v771 = vld [vmem:[%s731 + $0x8] sm:$0xf]
        %v772 = vld [vmem:[%s731 + $0xc] sm:$0xf]
        %v773 = vld [vmem:[%s736] sm:$0xf]
        %v774 = vld [vmem:[%s736 + $0x4] sm:$0xf]
        %v775 = vld [vmem:[%s736 + $0x8] sm:$0xf]
        %v776 = vld [vmem:[%s736 + $0xc] sm:$0xf]
        %v777 = vld [vmem:[%s736 + $0x10] sm:$0xf]
        %v778 = vld [vmem:[%s736 + $0x14] sm:$0xf]
        %v785 = vunpack.c.l.b16 %v773
        %v786 = vunpack.c.l.b16 %v774
        %v787 = vunpack.c.l.b16 %v775
        %v788 = vunpack.c.l.b16 %v776
        %v789 = vunpack.c.l.b16 %v777
        %v790 = vunpack.c.l.b16 %v778
        %v791 = vpack.c.b16 %v786, %v785
        %v792 = vpack.c.b16 %v788, %v787
        %v793 = vpack.c.b16 %v790, %v789
        %vm797 = vcmask 392192
        %v799 = vsel %vm797, %v764, 0
        %801 = vmatprep.subr.bf16.mxu0 0
        %802 = vmatpush1.bf16.msra.mxu0 %v791
        %803 = vmatprep.subr.bf16.mxu0 0
        %804 = vmatpush1.bf16.msra.mxu0 %v792
        %805 = vmatprep.subr.bf16.mxu0 0
        %806 = vmatpush1.bf16.msra.mxu0 %v793
        %807 = vmatprep.subr.bf16.mxu0 0
        %808 = vmatpush1.bf16.msra.mxu0 0
        %809 = vmatprep.subr.bf16.mxu0 0
        %810 = vmatpush1.bf16.msra.mxu0 0
        %811 = vmatprep.subr.bf16.mxu0 0
        %812 = vmatpush1.bf16.msra.mxu0 0
        %813 = vmatprep.subr.bf16.mxu0 0
        %814 = vmatpush1.bf16.msra.mxu0 0
        %815 = vmatprep.subr.bf16.mxu0 0
        %816 = vmatpush1.bf16.msra.mxu0 0
        %817 = vmatprep.subr.bf16.mxu0 0
        %818 = vmatpush1.bf16.msra.mxu0 0
        %819 = vmatprep.subr.bf16.mxu0 0
        %820 = vmatpush1.bf16.msra.mxu0 0
        %821 = vmatprep.subr.bf16.mxu0 0
        %822 = vmatpush1.bf16.msra.mxu0 0
        %823 = vmatprep.subr.bf16.mxu0 0
        %824 = vmatpush1.bf16.msra.mxu0 0
        %825 = vmatprep.subr.bf16.mxu0 0
        %826 = vmatpush1.bf16.msra.mxu0 0
        %827 = vmatprep.subr.bf16.mxu0 0
        %828 = vmatpush1.bf16.msra.mxu0 0
        %829 = vmatprep.subr.bf16.mxu0 0
        %830 = vmatpush1.bf16.msra.mxu0 0
        %831 = vmatprep.subr.bf16.mxu0 0
        %832 = vmatpush1.bf16.msra.mxu0 0
        %833 = vmatprep.mubr.bf16.mxu0 0
        %834 = vmatmul.mubr.bf16.gmra.mrb[0].mxu0 %v799
        %v835 = vpop.f32.mrb[0].mxu0
        %v836 = vadd.f32 0.0, %v835
        %v837 = vpop.f32.mrb[0].mxu0
        %v838 = vpop.f32.mrb[0].mxu0
        %v839 = vpop.f32.mrb[0].mxu0
        %840 = vdwg.mxu0
        %v845 = vunpack.c.l.b16 %v769
        %v846 = vunpack.c.l.b16 %v770
        %v847 = vunpack.c.l.b16 %v771
        %v848 = vunpack.c.l.b16 %v772
        %v849 = vpack.c.b16 %v846, %v845
        %v850 = vpack.c.b16 %v848, %v847
        %vm853 = vcmask 261120
        %v855 = vsel %vm853, %v763, 0
        %857 = vmatprep.subr.bf16.mxu0 0
        %858 = vmatpush1.bf16.msra.mxu0 %v849
        %859 = vmatprep.subr.bf16.mxu0 0
        %860 = vmatpush1.bf16.msra.mxu0 %v850
        %861 = vmatprep.subr.bf16.mxu0 0
        %862 = vmatpush1.bf16.msra.mxu0 0
        %863 = vmatprep.subr.bf16.mxu0 0
        %864 = vmatpush1.bf16.msra.mxu0 0
        %865 = vmatprep.subr.bf16.mxu0 0
        %866 = vmatpush1.bf16.msra.mxu0 0
        %867 = vmatprep.subr.bf16.mxu0 0
        %868 = vmatpush1.bf16.msra.mxu0 0
        %869 = vmatprep.subr.bf16.mxu0 0
        %870 = vmatpush1.bf16.msra.mxu0 0
        %871 = vmatprep.subr.bf16.mxu0 0
        %872 = vmatpush1.bf16.msra.mxu0 0
        %873 = vmatprep.subr.bf16.mxu0 0
        %874 = vmatpush1.bf16.msra.mxu0 0
        %875 = vmatprep.subr.bf16.mxu0 0
        %876 = vmatpush1.bf16.msra.mxu0 0
        %877 = vmatprep.subr.bf16.mxu0 0
        %878 = vmatpush1.bf16.msra.mxu0 0
        %879 = vmatprep.subr.bf16.mxu0 0
        %880 = vmatpush1.bf16.msra.mxu0 0
        %881 = vmatprep.subr.bf16.mxu0 0
        %882 = vmatpush1.bf16.msra.mxu0 0
        %883 = vmatprep.subr.bf16.mxu0 0
        %884 = vmatpush1.bf16.msra.mxu0 0
        %885 = vmatprep.subr.bf16.mxu0 0
        %886 = vmatpush1.bf16.msra.mxu0 0
        %887 = vmatprep.subr.bf16.mxu0 0
        %888 = vmatpush1.bf16.msra.mxu0 0
        %889 = vmatprep.mubr.bf16.mxu0 0
        %890 = vmatmul.mubr.bf16.gmra.mrb[0].mxu0 %v855
        %v891 = vpop.f32.mrb[0].mxu0
        %v892 = vadd.f32 %v836, %v891
        %v893 = vpop.f32.mrb[0].mxu0
        %v894 = vpop.f32.mrb[0].mxu0
        %v895 = vpop.f32.mrb[0].mxu0
        %896 = vdwg.mxu0
        %v897 = vlaneseq
        %v898 = vshrl.u32 %v897, 7
        %v899 = vsub.s32 0, %v898
        %v900 = vrot.slane %v768, %v899
        %v901 = vadd.f32 %v892, %v900
        %v902 = vpack.c.bf16 %v901, %v901
        %vm903 = vcmask 257024
        %904 = vst.msk [vmem:[#allocation3] sm:$0xf] %vm903, %v902
        %v905 = vld [vmem:[%s741] sm:$0xf]
        %v906 = vld [vmem:[%s741 + $0x4] sm:$0xf]
        %v907 = vld [vmem:[%s741 + $0x8] sm:$0xf]
        %v908 = vld [vmem:[%s741 + $0xc] sm:$0xf]
        %v909 = vld [vmem:[%s741 + $0x10] sm:$0xf]
        %v910 = vld [vmem:[%s741 + $0x14] sm:$0xf]
        %v911 = vlaneseq
        %v912 = vshrl.u32 %v911, 7
        %v913 = vsub.s32 1, %v912
        %v914 = vrot.slane %v768, %v913
        %v917 = vunpack.c.l.b16 %v765
        %v918 = vunpack.c.l.b16 %v766
        %v919 = vpack.c.b16 %v918, %v917
        %v926 = vunpack.c.l.b16 %v905
        %v927 = vunpack.c.l.b16 %v906
        %v928 = vunpack.c.l.b16 %v907
        %v929 = vunpack.c.l.b16 %v908
        %v930 = vunpack.c.l.b16 %v909
        %v931 = vunpack.c.l.b16 %v910
        %v932 = vpack.c.b16 %v927, %v926
        %v933 = vpack.c.b16 %v929, %v928
        %v934 = vpack.c.b16 %v931, %v930
        %v939 = vsel %vm797, %v919, 0
        %941 = vmatprep.subr.bf16.mxu0 0
        %942 = vmatpush1.bf16.msra.mxu0 %v932
        %943 = vmatprep.subr.bf16.mxu0 0
        %944 = vmatpush1.bf16.msra.mxu0 %v933
        %945 = vmatprep.subr.bf16.mxu0 0
        %946 = vmatpush1.bf16.msra.mxu0 %v934
        %947 = vmatprep.subr.bf16.mxu0 0
        %948 = vmatpush1.bf16.msra.mxu0 0
        %949 = vmatprep.subr.bf16.mxu0 0
        %950 = vmatpush1.bf16.msra.mxu0 0
        %951 = vmatprep.subr.bf16.mxu0 0
        %952 = vmatpush1.bf16.msra.mxu0 0
        %953 = vmatprep.subr.bf16.mxu0 0
        %954 = vmatpush1.bf16.msra.mxu0 0
        %955 = vmatprep.subr.bf16.mxu0 0
        %956 = vmatpush1.bf16.msra.mxu0 0
        %957 = vmatprep.subr.bf16.mxu0 0
        %958 = vmatpush1.bf16.msra.mxu0 0
        %959 = vmatprep.subr.bf16.mxu0 0
        %960 = vmatpush1.bf16.msra.mxu0 0
        %961 = vmatprep.subr.bf16.mxu0 0
        %962 = vmatpush1.bf16.msra.mxu0 0
        %963 = vmatprep.subr.bf16.mxu0 0
        %964 = vmatpush1.bf16.msra.mxu0 0
        %965 = vmatprep.subr.bf16.mxu0 0
        %966 = vmatpush1.bf16.msra.mxu0 0
        %967 = vmatprep.subr.bf16.mxu0 0
        %968 = vmatpush1.bf16.msra.mxu0 0
        %969 = vmatprep.subr.bf16.mxu0 0
        %970 = vmatpush1.bf16.msra.mxu0 0
        %971 = vmatprep.subr.bf16.mxu0 0
        %972 = vmatpush1.bf16.msra.mxu0 0
        %973 = vmatprep.mubr.bf16.mxu0 0
        %974 = vmatmul.mubr.bf16.gmra.mrb[0].mxu0 %v939
        %v975 = vpop.f32.mrb[0].mxu0
        %v976 = vadd.f32 %v914, %v975
        %v977 = vpop.f32.mrb[0].mxu0
        %v978 = vpop.f32.mrb[0].mxu0
        %v979 = vadd.f32 %v914, %v978
        %v980 = vpop.f32.mrb[0].mxu0
        %981 = vdwg.mxu0
        %v982 = vpack.c.bf16 %v979, %v976
        %983 = vst.msk [vmem:[#allocation4] sm:$0xff] %vm853, %v982
        %v984 = vld [vmem:[%s746] sm:$0xf]
        %v985 = vld [vmem:[%s746 + $0x4] sm:$0xf]
        %v986 = vld [vmem:[%s746 + $0x8] sm:$0xf]
        %v987 = vld [vmem:[%s746 + $0xc] sm:$0xf]
        %v988 = vld [vmem:[%s746 + $0x10] sm:$0xf]
        %v989 = vld [vmem:[%s746 + $0x14] sm:$0xf]
        %v990 = vlaneseq
        %v991 = vshrl.u32 %v990, 7
        %v992 = vsub.s32 2, %v991
        %v993 = vrot.slane %v768, %v992
        %v1000 = vunpack.c.l.b16 %v984
        %v1001 = vunpack.c.l.b16 %v985
        %v1002 = vunpack.c.l.b16 %v986
        %v1003 = vunpack.c.l.b16 %v987
        %v1004 = vunpack.c.l.b16 %v988
        %v1005 = vunpack.c.l.b16 %v989
        %v1006 = vpack.c.b16 %v1001, %v1000
        %v1007 = vpack.c.b16 %v1003, %v1002
        %v1008 = vpack.c.b16 %v1005, %v1004
        %1012 = vmatprep.subr.bf16.mxu0 0
        %1013 = vmatpush1.bf16.msra.mxu0 %v1006
        %1014 = vmatprep.subr.bf16.mxu0 0
        %1015 = vmatpush1.bf16.msra.mxu0 %v1007
        %1016 = vmatprep.subr.bf16.mxu0 0
        %1017 = vmatpush1.bf16.msra.mxu0 %v1008
        %1018 = vmatprep.subr.bf16.mxu0 0
        %1019 = vmatpush1.bf16.msra.mxu0 0
        %1020 = vmatprep.subr.bf16.mxu0 0
        %1021 = vmatpush1.bf16.msra.mxu0 0
        %1022 = vmatprep.subr.bf16.mxu0 0
        %1023 = vmatpush1.bf16.msra.mxu0 0
        %1024 = vmatprep.subr.bf16.mxu0 0
        %1025 = vmatpush1.bf16.msra.mxu0 0
        %1026 = vmatprep.subr.bf16.mxu0 0
        %1027 = vmatpush1.bf16.msra.mxu0 0
        %1028 = vmatprep.subr.bf16.mxu0 0
        %1029 = vmatpush1.bf16.msra.mxu0 0
        %1030 = vmatprep.subr.bf16.mxu0 0
        %1031 = vmatpush1.bf16.msra.mxu0 0
        %1032 = vmatprep.subr.bf16.mxu0 0
        %1033 = vmatpush1.bf16.msra.mxu0 0
        %1034 = vmatprep.subr.bf16.mxu0 0
        %1035 = vmatpush1.bf16.msra.mxu0 0
        %1036 = vmatprep.subr.bf16.mxu0 0
        %1037 = vmatpush1.bf16.msra.mxu0 0
        %1038 = vmatprep.subr.bf16.mxu0 0
        %1039 = vmatpush1.bf16.msra.mxu0 0
        %1040 = vmatprep.subr.bf16.mxu0 0
        %1041 = vmatpush1.bf16.msra.mxu0 0
        %1042 = vmatprep.subr.bf16.mxu0 0
        %1043 = vmatpush1.bf16.msra.mxu0 0
        %1044 = vmatprep.mubr.bf16.mxu0 0
        %1045 = vmatmul.mubr.bf16.gmra.mrb[0].mxu0 %v939
        %v1046 = vpop.f32.mrb[0].mxu0
        %v1047 = vadd.f32 %v993, %v1046
        %v1048 = vpop.f32.mrb[0].mxu0
        %v1049 = vpop.f32.mrb[0].mxu0
        %v1050 = vadd.f32 %v993, %v1049
        %v1051 = vpop.f32.mrb[0].mxu0
        %1052 = vdwg.mxu0
        %v1053 = vpack.c.bf16 %v1050, %v1047
        %1054 = vst.msk [vmem:[#allocation5] sm:$0xff] %vm853, %v1053
        %v1055 = vld [vmem:[#allocation3] sm:$0xf]
        %v1056 = vld [vmem:[#allocation4] sm:$0xff]
        %v1057 = vld [vmem:[#allocation5] sm:$0xff]
        %v1059 = vlaneseq
        %v1060 = vshrl.u32 %v1059, 7
        %v1061 = vsub.s32 0, %v1060
        %v1062 = vrot.slane %v767, %v1061
        %vm1064 = vcmask 64512
        %v1066 = vsel %vm1064, %v1055, 0
        %v1069 = vsel %vm1064, %v1056, 0
        %1071 = vmatprep.subr.bf16.mxu0 0
        %1072 = vmatpush1.bf16.xpose.msra.mxu0 %v1069
        %1073 = vmatprep.subr.bf16.mxu0 0
        %1074 = vmatpush1.bf16.xpose.msra.mxu0 0
        %1075 = vmatprep.subr.bf16.mxu0 0
        %1076 = vmatpush1.bf16.xpose.msra.mxu0 0
        %1077 = vmatprep.subr.bf16.mxu0 0
        %1078 = vmatpush1.bf16.xpose.msra.mxu0 0
        %1079 = vmatprep.subr.bf16.mxu0 0
        %1080 = vmatpush1.bf16.xpose.msra.mxu0 0
        %1081 = vmatprep.subr.bf16.mxu0 0
        %1082 = vmatpush1.bf16.xpose.msra.mxu0 0
        %1083 = vmatprep.subr.bf16.mxu0 0
        %1084 = vmatpush1.bf16.xpose.msra.mxu0 0
        %1085 = vmatprep.subr.bf16.mxu0 0
        %1086 = vmatpush1.bf16.xpose.msra.mxu0 0
        %1087 = vmatprep.subr.bf16.mxu0 0
        %1088 = vmatpush1.bf16.xpose.msra.mxu0 0
        %1089 = vmatprep.subr.bf16.mxu0 0
        %1090 = vmatpush1.bf16.xpose.msra.mxu0 0
        %1091 = vmatprep.subr.bf16.mxu0 0
        %1092 = vmatpush1.bf16.xpose.msra.mxu0 0
        %1093 = vmatprep.subr.bf16.mxu0 0
        %1094 = vmatpush1.bf16.xpose.msra.mxu0 0
        %1095 = vmatprep.subr.bf16.mxu0 0
        %1096 = vmatpush1.bf16.xpose.msra.mxu0 0
        %1097 = vmatprep.subr.bf16.mxu0 0
        %1098 = vmatpush1.bf16.xpose.msra.mxu0 0
        %1099 = vmatprep.subr.bf16.mxu0 0
        %1100 = vmatpush1.bf16.xpose.msra.mxu0 0
        %1101 = vmatprep.subr.bf16.mxu0 0
        %1102 = vmatpush1.bf16.xpose.msra.mxu0 0
        %1103 = vmatprep.mubr.bf16.mxu0 0
        %1104 = vmatmul.mubr.bf16.gmra.mrb[0].mxu0 %v1066
        %v1105 = vpop.f32.mrb[0].mxu0
        %v1106 = vadd.f32 %v1062, %v1105
        %v1107 = vpop.f32.mrb[0].mxu0
        %v1108 = vpop.f32.mrb[0].mxu0
        %v1109 = vpop.f32.mrb[0].mxu0
        %1110 = vdwg.mxu0
        %vm1111 = vcmask 130048
        %v1112 = vsel %vm1111, %v1106, -inf
        %1113 = vmax.xlane.f32.xlu0 %v1112
        %v1114 = vpop.xlane.xlu0 %1113
        %v1115 = vsub.f32 %v1106, %v1114
        %v1116 = vmul.f32 %v1115, 1.442695
        %v1117 = vpow.pop %v1116
        %v1118 = vsel %vm1111, %v1117, 0.0
        %1119 = vadd.xlane.f32.xlu0 %v1118
        %v1120 = vpop.xlane.xlu0 %1119
        %v1121 = vrcp.pop %v1120
        %v1122 = vmul.f32 %v1117, %v1121
        %v1123 = vpack.c.bf16 %v1122, %v1122
        %v1125 = vsel %vm1111, %v1123, 0
        %1127 = vmatprep.subr.bf16.mxu0 0
        %1128 = vmatpush1.bf16.msra.mxu0 %v1057
        %1129 = vmatprep.subr.bf16.mxu0 0
        %1130 = vmatpush1.bf16.msra.mxu0 0
        %1131 = vmatprep.subr.bf16.mxu0 0
        %1132 = vmatpush1.bf16.msra.mxu0 0
        %1133 = vmatprep.subr.bf16.mxu0 0
        %1134 = vmatpush1.bf16.msra.mxu0 0
        %1135 = vmatprep.subr.bf16.mxu0 0
        %1136 = vmatpush1.bf16.msra.mxu0 0
        %1137 = vmatprep.subr.bf16.mxu0 0
        %1138 = vmatpush1.bf16.msra.mxu0 0
        %1139 = vmatprep.subr.bf16.mxu0 0
        %1140 = vmatpush1.bf16.msra.mxu0 0
        %1141 = vmatprep.subr.bf16.mxu0 0
        %1142 = vmatpush1.bf16.msra.mxu0 0
        %1143 = vmatprep.subr.bf16.mxu0 0
        %1144 = vmatpush1.bf16.msra.mxu0 0
        %1145 = vmatprep.subr.bf16.mxu0 0
        %1146 = vmatpush1.bf16.msra.mxu0 0
        %1147 = vmatprep.subr.bf16.mxu0 0
        %1148 = vmatpush1.bf16.msra.mxu0 0
        %1149 = vmatprep.subr.bf16.mxu0 0
        %1150 = vmatpush1.bf16.msra.mxu0 0
        %1151 = vmatprep.subr.bf16.mxu0 0
        %1152 = vmatpush1.bf16.msra.mxu0 0
        %1153 = vmatprep.subr.bf16.mxu0 0
        %1154 = vmatpush1.bf16.msra.mxu0 0
        %1155 = vmatprep.subr.bf16.mxu0 0
        %1156 = vmatpush1.bf16.msra.mxu0 0
        %1157 = vmatprep.subr.bf16.mxu0 0
        %1158 = vmatpush1.bf16.msra.mxu0 0
        %1159 = vmatprep.mubr.bf16.mxu0 0
        %1160 = vmatmul.mubr.bf16.gmra.mrb[0].mxu0 %v1125
        %v1161 = vpop.f32.mrb[0].mxu0
        %v1162 = vadd.f32 0.0, %v1161
        %v1163 = vpop.f32.mrb[0].mxu0
        %v1164 = vpop.f32.mrb[0].mxu0
        %v1165 = vpop.f32.mrb[0].mxu0
        %1166 = vdwg.mxu0
        %v1167 = vpack.c.bf16 %v1162, %v1162
        %vm1168 = vcmask 60416
        %1169 = vst.msk [vmem:[#allocation6] sm:$0xf] %vm1168, %v1167
        %v1170 = vld [vmem:[#allocation3] sm:$0xf]
        %v1171 = vld [vmem:[#allocation4] sm:$0xff]
        %v1172 = vld [vmem:[#allocation5] sm:$0xff]
        %v1174 = vunpack.c.l.b16 %v1170
        %v1175 = vpack.c.b16 %v1174, %v1174
        %1176 = vrot.lane.b32.xlu0 %v1175, 120
        %v1177 = vpop.permute.xlu0 %1176
        %1179 = vrot.lane.b32.xlu0 %v1171, 120
        %v1180 = vpop.permute.xlu0 %1179
        %v1182 = vsel %vm1064, %v1177, 0
        %v1185 = vsel %vm1064, %v1180, 0
        %1187 = vmatprep.subr.bf16.mxu0 0
        %1188 = vmatpush1.bf16.xpose.msra.mxu0 %v1185
        %1189 = vmatprep.subr.bf16.mxu0 0
        %1190 = vmatpush1.bf16.xpose.msra.mxu0 0
        %1191 = vmatprep.subr.bf16.mxu0 0
        %1192 = vmatpush1.bf16.xpose.msra.mxu0 0
        %1193 = vmatprep.subr.bf16.mxu0 0
        %1194 = vmatpush1.bf16.xpose.msra.mxu0 0
        %1195 = vmatprep.subr.bf16.mxu0 0
        %1196 = vmatpush1.bf16.xpose.msra.mxu0 0
        %1197 = vmatprep.subr.bf16.mxu0 0
        %1198 = vmatpush1.bf16.xpose.msra.mxu0 0
        %1199 = vmatprep.subr.bf16.mxu0 0
        %1200 = vmatpush1.bf16.xpose.msra.mxu0 0
        %1201 = vmatprep.subr.bf16.mxu0 0
        %1202 = vmatpush1.bf16.xpose.msra.mxu0 0
        %1203 = vmatprep.subr.bf16.mxu0 0
        %1204 = vmatpush1.bf16.xpose.msra.mxu0 0
        %1205 = vmatprep.subr.bf16.mxu0 0
        %1206 = vmatpush1.bf16.xpose.msra.mxu0 0
        %1207 = vmatprep.subr.bf16.mxu0 0
        %1208 = vmatpush1.bf16.xpose.msra.mxu0 0
        %1209 = vmatprep.subr.bf16.mxu0 0
        %1210 = vmatpush1.bf16.xpose.msra.mxu0 0
        %1211 = vmatprep.subr.bf16.mxu0 0
        %1212 = vmatpush1.bf16.xpose.msra.mxu0 0
        %1213 = vmatprep.subr.bf16.mxu0 0
        %1214 = vmatpush1.bf16.xpose.msra.mxu0 0
        %1215 = vmatprep.subr.bf16.mxu0 0
        %1216 = vmatpush1.bf16.xpose.msra.mxu0 0
        %1217 = vmatprep.subr.bf16.mxu0 0
        %1218 = vmatpush1.bf16.xpose.msra.mxu0 0
        %1219 = vmatprep.mubr.bf16.mxu0 0
        %1220 = vmatmul.mubr.bf16.gmra.mrb[0].mxu0 %v1182
        %v1221 = vpop.f32.mrb[0].mxu0
        %v1222 = vadd.f32 %v1062, %v1221
        %v1223 = vpop.f32.mrb[0].mxu0
        %v1224 = vpop.f32.mrb[0].mxu0
        %v1225 = vpop.f32.mrb[0].mxu0
        %1226 = vdwg.mxu0
        %v1227 = vsel %vm1111, %v1222, -inf
        %1228 = vmax.xlane.f32.xlu0 %v1227
        %v1229 = vpop.xlane.xlu0 %1228
        %v1230 = vsub.f32 %v1222, %v1229
        %v1231 = vmul.f32 %v1230, 1.442695
        %v1232 = vpow.pop %v1231
        %v1233 = vsel %vm1111, %v1232, 0.0
        %1234 = vadd.xlane.f32.xlu0 %v1233
        %v1235 = vpop.xlane.xlu0 %1234
        %v1236 = vrcp.pop %v1235
        %v1237 = vmul.f32 %v1232, %v1236
        %v1238 = vpack.c.bf16 %v1237, %v1237
        %1240 = vrot.lane.b32.xlu0 %v1172, 120
        %v1241 = vpop.permute.xlu0 %1240
        %v1244 = vsel %vm1111, %v1238, 0
        %1246 = vmatprep.subr.bf16.mxu0 0
        %1247 = vmatpush1.bf16.msra.mxu0 %v1241
        %1248 = vmatprep.subr.bf16.mxu0 0
        %1249 = vmatpush1.bf16.msra.mxu0 0
        %1250 = vmatprep.subr.bf16.mxu0 0
        %1251 = vmatpush1.bf16.msra.mxu0 0
        %1252 = vmatprep.subr.bf16.mxu0 0
        %1253 = vmatpush1.bf16.msra.mxu0 0
        %1254 = vmatprep.subr.bf16.mxu0 0
        %1255 = vmatpush1.bf16.msra.mxu0 0
        %1256 = vmatprep.subr.bf16.mxu0 0
        %1257 = vmatpush1.bf16.msra.mxu0 0
        %1258 = vmatprep.subr.bf16.mxu0 0
        %1259 = vmatpush1.bf16.msra.mxu0 0
        %1260 = vmatprep.subr.bf16.mxu0 0
        %1261 = vmatpush1.bf16.msra.mxu0 0
        %1262 = vmatprep.subr.bf16.mxu0 0
        %1263 = vmatpush1.bf16.msra.mxu0 0
        %1264 = vmatprep.subr.bf16.mxu0 0
        %1265 = vmatpush1.bf16.msra.mxu0 0
        %1266 = vmatprep.subr.bf16.mxu0 0
        %1267 = vmatpush1.bf16.msra.mxu0 0
        %1268 = vmatprep.subr.bf16.mxu0 0
        %1269 = vmatpush1.bf16.msra.mxu0 0
        %1270 = vmatprep.subr.bf16.mxu0 0
        %1271 = vmatpush1.bf16.msra.mxu0 0
        %1272 = vmatprep.subr.bf16.mxu0 0
        %1273 = vmatpush1.bf16.msra.mxu0 0
        %1274 = vmatprep.subr.bf16.mxu0 0
        %1275 = vmatpush1.bf16.msra.mxu0 0
        %1276 = vmatprep.subr.bf16.mxu0 0
        %1277 = vmatpush1.bf16.msra.mxu0 0
        %1278 = vmatprep.mubr.bf16.mxu0 0
        %1279 = vmatmul.mubr.bf16.gmra.mrb[0].mxu0 %v1244
        %v1280 = vpop.f32.mrb[0].mxu0
        %v1281 = vadd.f32 0.0, %v1280
        %v1282 = vpop.f32.mrb[0].mxu0
        %v1283 = vpop.f32.mrb[0].mxu0
        %v1284 = vpop.f32.mrb[0].mxu0
        %1285 = vdwg.mxu0
        %v1286 = vpack.c.bf16 %v1281, %v1281
        %v1288 = vunpack.c.l.b16 %v1286
        %v1289 = vpack.c.b16 %v1288, %v1288
        %1290 = vrot.lane.b32.xlu0 %v1289, 8
        %v1291 = vpop.permute.xlu0 %1290
        %vm1293 = vcmask 126016
        %1294 = vst.msk [vmem:[#allocation6] sm:$0xf] %vm1293, %v1291
        %v1295 = vld [vmem:[#allocation3] sm:$0xf]
        %v1296 = vld [vmem:[#allocation4] sm:$0xff]
        %v1297 = vld [vmem:[#allocation5] sm:$0xff]
        %v1299 = vunpack.c.l.b16 %v1295
        %v1300 = vpack.c.b16 %v1299, %v1299
        %1301 = vrot.lane.b32.xlu0 %v1300, 112
        %v1302 = vpop.permute.xlu0 %1301
        %1304 = vrot.lane.b32.xlu0 %v1296, 112
        %v1305 = vpop.permute.xlu0 %1304
        %v1307 = vsel %vm1064, %v1302, 0
        %v1310 = vsel %vm1064, %v1305, 0
        %1312 = vmatprep.subr.bf16.mxu0 0
        %1313 = vmatpush1.bf16.xpose.msra.mxu0 %v1310
        %1314 = vmatprep.subr.bf16.mxu0 0
        %1315 = vmatpush1.bf16.xpose.msra.mxu0 0
        %1316 = vmatprep.subr.bf16.mxu0 0
        %1317 = vmatpush1.bf16.xpose.msra.mxu0 0
        %1318 = vmatprep.subr.bf16.mxu0 0
        %1319 = vmatpush1.bf16.xpose.msra.mxu0 0
        %1320 = vmatprep.subr.bf16.mxu0 0
        %1321 = vmatpush1.bf16.xpose.msra.mxu0 0
        %1322 = vmatprep.subr.bf16.mxu0 0
        %1323 = vmatpush1.bf16.xpose.msra.mxu0 0
        %1324 = vmatprep.subr.bf16.mxu0 0
        %1325 = vmatpush1.bf16.xpose.msra.mxu0 0
        %1326 = vmatprep.subr.bf16.mxu0 0
        %1327 = vmatpush1.bf16.xpose.msra.mxu0 0
        %1328 = vmatprep.subr.bf16.mxu0 0
        %1329 = vmatpush1.bf16.xpose.msra.mxu0 0
        %1330 = vmatprep.subr.bf16.mxu0 0
        %1331 = vmatpush1.bf16.xpose.msra.mxu0 0
        %1332 = vmatprep.subr.bf16.mxu0 0
        %1333 = vmatpush1.bf16.xpose.msra.mxu0 0
        %1334 = vmatprep.subr.bf16.mxu0 0
        %1335 = vmatpush1.bf16.xpose.msra.mxu0 0
        %1336 = vmatprep.subr.bf16.mxu0 0
        %1337 = vmatpush1.bf16.xpose.msra.mxu0 0
        %1338 = vmatprep.subr.bf16.mxu0 0
        %1339 = vmatpush1.bf16.xpose.msra.mxu0 0
        %1340 = vmatprep.subr.bf16.mxu0 0
        %1341 = vmatpush1.bf16.xpose.msra.mxu0 0
        %1342 = vmatprep.subr.bf16.mxu0 0
        %1343 = vmatpush1.bf16.xpose.msra.mxu0 0
        %1344 = vmatprep.mubr.bf16.mxu0 0
        %1345 = vmatmul.mubr.bf16.gmra.mrb[0].mxu0 %v1307
        %v1346 = vpop.f32.mrb[0].mxu0
        %v1347 = vadd.f32 %v1062, %v1346
        %v1348 = vpop.f32.mrb[0].mxu0
        %v1349 = vpop.f32.mrb[0].mxu0
        %v1350 = vpop.f32.mrb[0].mxu0
        %1351 = vdwg.mxu0
        %v1352 = vsel %vm1111, %v1347, -inf
        %1353 = vmax.xlane.f32.xlu0 %v1352
        %v1354 = vpop.xlane.xlu0 %1353
        %v1355 = vsub.f32 %v1347, %v1354
        %v1356 = vmul.f32 %v1355, 1.442695
        %v1357 = vpow.pop %v1356
        %v1358 = vsel %vm1111, %v1357, 0.0
        %1359 = vadd.xlane.f32.xlu0 %v1358
        %v1360 = vpop.xlane.xlu0 %1359
        %v1361 = vrcp.pop %v1360
        %v1362 = vmul.f32 %v1357, %v1361
        %v1363 = vpack.c.bf16 %v1362, %v1362
        %1365 = vrot.lane.b32.xlu0 %v1297, 112
        %v1366 = vpop.permute.xlu0 %1365
        %v1369 = vsel %vm1111, %v1363, 0
        %1371 = vmatprep.subr.bf16.mxu0 0
        %1372 = vmatpush1.bf16.msra.mxu0 %v1366
        %1373 = vmatprep.subr.bf16.mxu0 0
        %1374 = vmatpush1.bf16.msra.mxu0 0
        %1375 = vmatprep.subr.bf16.mxu0 0
        %1376 = vmatpush1.bf16.msra.mxu0 0
        %1377 = vmatprep.subr.bf16.mxu0 0
        %1378 = vmatpush1.bf16.msra.mxu0 0
        %1379 = vmatprep.subr.bf16.mxu0 0
        %1380 = vmatpush1.bf16.msra.mxu0 0
        %1381 = vmatprep.subr.bf16.mxu0 0
        %1382 = vmatpush1.bf16.msra.mxu0 0
        %1383 = vmatprep.subr.bf16.mxu0 0
        %1384 = vmatpush1.bf16.msra.mxu0 0
        %1385 = vmatprep.subr.bf16.mxu0 0
        %1386 = vmatpush1.bf16.msra.mxu0 0
        %1387 = vmatprep.subr.bf16.mxu0 0
        %1388 = vmatpush1.bf16.msra.mxu0 0
        %1389 = vmatprep.subr.bf16.mxu0 0
        %1390 = vmatpush1.bf16.msra.mxu0 0
        %1391 = vmatprep.subr.bf16.mxu0 0
        %1392 = vmatpush1.bf16.msra.mxu0 0
        %1393 = vmatprep.subr.bf16.mxu0 0
        %1394 = vmatpush1.bf16.msra.mxu0 0
        %1395 = vmatprep.subr.bf16.mxu0 0
        %1396 = vmatpush1.bf16.msra.mxu0 0
        %1397 = vmatprep.subr.bf16.mxu0 0
        %1398 = vmatpush1.bf16.msra.mxu0 0
        %1399 = vmatprep.subr.bf16.mxu0 0
        %1400 = vmatpush1.bf16.msra.mxu0 0
        %1401 = vmatprep.subr.bf16.mxu0 0
        %1402 = vmatpush1.bf16.msra.mxu0 0
        %1403 = vmatprep.mubr.bf16.mxu0 0
        %1404 = vmatmul.mubr.bf16.gmra.mrb[0].mxu0 %v1369
        %v1405 = vpop.f32.mrb[0].mxu0
        %v1406 = vadd.f32 0.0, %v1405
        %v1407 = vpop.f32.mrb[0].mxu0
        %v1408 = vpop.f32.mrb[0].mxu0
        %v1409 = vpop.f32.mrb[0].mxu0
        %1410 = vdwg.mxu0
        %v1411 = vpack.c.bf16 %v1406, %v1406
        %v1413 = vunpack.c.l.b16 %v1411
        %v1414 = vpack.c.b16 %v1413, %v1413
        %1415 = vrot.lane.b32.xlu0 %v1414, 16
        %v1416 = vpop.permute.xlu0 %1415
        %vm1418 = vcmask 191616
        %1419 = vst.msk [vmem:[#allocation6] sm:$0xf] %vm1418, %v1416
        %v1420 = vld [vmem:[#allocation3] sm:$0xf]
        %v1421 = vld [vmem:[#allocation4] sm:$0xff]
        %v1422 = vld [vmem:[#allocation5] sm:$0xff]
        %v1424 = vunpack.c.l.b16 %v1420
        %v1425 = vpack.c.b16 %v1424, %v1424
        %1426 = vrot.lane.b32.xlu0 %v1425, 104
        %v1427 = vpop.permute.xlu0 %1426
        %1429 = vrot.lane.b32.xlu0 %v1421, 104
        %v1430 = vpop.permute.xlu0 %1429
        %v1432 = vsel %vm1064, %v1427, 0
        %v1435 = vsel %vm1064, %v1430, 0
        %1437 = vmatprep.subr.bf16.mxu0 0
        %1438 = vmatpush1.bf16.xpose.msra.mxu0 %v1435
        %1439 = vmatprep.subr.bf16.mxu0 0
        %1440 = vmatpush1.bf16.xpose.msra.mxu0 0
        %1441 = vmatprep.subr.bf16.mxu0 0
        %1442 = vmatpush1.bf16.xpose.msra.mxu0 0
        %1443 = vmatprep.subr.bf16.mxu0 0
        %1444 = vmatpush1.bf16.xpose.msra.mxu0 0
        %1445 = vmatprep.subr.bf16.mxu0 0
        %1446 = vmatpush1.bf16.xpose.msra.mxu0 0
        %1447 = vmatprep.subr.bf16.mxu0 0
        %1448 = vmatpush1.bf16.xpose.msra.mxu0 0
        %1449 = vmatprep.subr.bf16.mxu0 0
        %1450 = vmatpush1.bf16.xpose.msra.mxu0 0
        %1451 = vmatprep.subr.bf16.mxu0 0
        %1452 = vmatpush1.bf16.xpose.msra.mxu0 0
        %1453 = vmatprep.subr.bf16.mxu0 0
        %1454 = vmatpush1.bf16.xpose.msra.mxu0 0
        %1455 = vmatprep.subr.bf16.mxu0 0
        %1456 = vmatpush1.bf16.xpose.msra.mxu0 0
        %1457 = vmatprep.subr.bf16.mxu0 0
        %1458 = vmatpush1.bf16.xpose.msra.mxu0 0
        %1459 = vmatprep.subr.bf16.mxu0 0
        %1460 = vmatpush1.bf16.xpose.msra.mxu0 0
        %1461 = vmatprep.subr.bf16.mxu0 0
        %1462 = vmatpush1.bf16.xpose.msra.mxu0 0
        %1463 = vmatprep.subr.bf16.mxu0 0
        %1464 = vmatpush1.bf16.xpose.msra.mxu0 0
        %1465 = vmatprep.subr.bf16.mxu0 0
        %1466 = vmatpush1.bf16.xpose.msra.mxu0 0
        %1467 = vmatprep.subr.bf16.mxu0 0
        %1468 = vmatpush1.bf16.xpose.msra.mxu0 0
        %1469 = vmatprep.mubr.bf16.mxu0 0
        %1470 = vmatmul.mubr.bf16.gmra.mrb[0].mxu0 %v1432
        %v1471 = vpop.f32.mrb[0].mxu0
        %v1472 = vadd.f32 %v1062, %v1471
        %v1473 = vpop.f32.mrb[0].mxu0
        %v1474 = vpop.f32.mrb[0].mxu0
        %v1475 = vpop.f32.mrb[0].mxu0
        %1476 = vdwg.mxu0
        %v1477 = vsel %vm1111, %v1472, -inf
        %1478 = vmax.xlane.f32.xlu0 %v1477
        %v1479 = vpop.xlane.xlu0 %1478
        %v1480 = vsub.f32 %v1472, %v1479
        %v1481 = vmul.f32 %v1480, 1.442695
        %v1482 = vpow.pop %v1481
        %v1483 = vsel %vm1111, %v1482, 0.0
        %1484 = vadd.xlane.f32.xlu0 %v1483
        %v1485 = vpop.xlane.xlu0 %1484
        %v1486 = vrcp.pop %v1485
        %v1487 = vmul.f32 %v1482, %v1486
        %v1488 = vpack.c.bf16 %v1487, %v1487
        %1490 = vrot.lane.b32.xlu0 %v1422, 104
        %v1491 = vpop.permute.xlu0 %1490
        %v1494 = vsel %vm1111, %v1488, 0
        %1496 = vmatprep.subr.bf16.mxu0 0
        %1497 = vmatpush1.bf16.msra.mxu0 %v1491
        %1498 = vmatprep.subr.bf16.mxu0 0
        %1499 = vmatpush1.bf16.msra.mxu0 0
        %1500 = vmatprep.subr.bf16.mxu0 0
        %1501 = vmatpush1.bf16.msra.mxu0 0
        %1502 = vmatprep.subr.bf16.mxu0 0
        %1503 = vmatpush1.bf16.msra.mxu0 0
        %1504 = vmatprep.subr.bf16.mxu0 0
        %1505 = vmatpush1.bf16.msra.mxu0 0
        %1506 = vmatprep.subr.bf16.mxu0 0
        %1507 = vmatpush1.bf16.msra.mxu0 0
        %1508 = vmatprep.subr.bf16.mxu0 0
        %1509 = vmatpush1.bf16.msra.mxu0 0
        %1510 = vmatprep.subr.bf16.mxu0 0
        %1511 = vmatpush1.bf16.msra.mxu0 0
        %1512 = vmatprep.subr.bf16.mxu0 0
        %1513 = vmatpush1.bf16.msra.mxu0 0
        %1514 = vmatprep.subr.bf16.mxu0 0
        %1515 = vmatpush1.bf16.msra.mxu0 0
        %1516 = vmatprep.subr.bf16.mxu0 0
        %1517 = vmatpush1.bf16.msra.mxu0 0
        %1518 = vmatprep.subr.bf16.mxu0 0
        %1519 = vmatpush1.bf16.msra.mxu0 0
        %1520 = vmatprep.subr.bf16.mxu0 0
        %1521 = vmatpush1.bf16.msra.mxu0 0
        %1522 = vmatprep.subr.bf16.mxu0 0
        %1523 = vmatpush1.bf16.msra.mxu0 0
        %1524 = vmatprep.subr.bf16.mxu0 0
        %1525 = vmatpush1.bf16.msra.mxu0 0
        %1526 = vmatprep.subr.bf16.mxu0 0
        %1527 = vmatpush1.bf16.msra.mxu0 0
        %1528 = vmatprep.mubr.bf16.mxu0 0
        %1529 = vmatmul.mubr.bf16.gmra.mrb[0].mxu0 %v1494
        %v1530 = vpop.f32.mrb[0].mxu0
        %v1531 = vadd.f32 0.0, %v1530
        %v1532 = vpop.f32.mrb[0].mxu0
        %v1533 = vpop.f32.mrb[0].mxu0
        %v1534 = vpop.f32.mrb[0].mxu0
        %1535 = vdwg.mxu0
        %v1536 = vpack.c.bf16 %v1531, %v1531
        %v1538 = vunpack.c.l.b16 %v1536
        %v1539 = vpack.c.b16 %v1538, %v1538
        %1540 = vrot.lane.b32.xlu0 %v1539, 24
        %v1541 = vpop.permute.xlu0 %1540
        %vm1543 = vcmask 257216
        %1544 = vst.msk [vmem:[#allocation6] sm:$0xf] %vm1543, %v1541
        %v1545 = vld [vmem:[#allocation2] sm:$0xff]
        %v1546 = vld [vmem:[#allocation6] sm:$0xf]
        %v1547 = vld [vmem:[%s751] sm:$0xf]
        %v1548 = vld [vmem:[%s751 + $0x4] sm:$0xf]
        %v1549 = vld [vmem:[%s751 + $0x8] sm:$0xf]
        %v1550 = vld [vmem:[%s751 + $0xc] sm:$0xf]
        %v1555 = vunpack.c.l.b16 %v1547
        %v1556 = vunpack.c.l.b16 %v1548
        %v1557 = vunpack.c.l.b16 %v1549
        %v1558 = vunpack.c.l.b16 %v1550
        %v1559 = vpack.c.b16 %v1556, %v1555
        %v1560 = vpack.c.b16 %v1558, %v1557
        %v1564 = vsel %vm853, %v1546, 0
        %1566 = vmatprep.subr.bf16.mxu0 0
        %1567 = vmatpush1.bf16.msra.mxu0 %v1559
        %1568 = vmatprep.subr.bf16.mxu0 0
        %1569 = vmatpush1.bf16.msra.mxu0 %v1560
        %1570 = vmatprep.subr.bf16.mxu0 0
        %1571 = vmatpush1.bf16.msra.mxu0 0
        %1572 = vmatprep.subr.bf16.mxu0 0
        %1573 = vmatpush1.bf16.msra.mxu0 0
        %1574 = vmatprep.subr.bf16.mxu0 0
        %1575 = vmatpush1.bf16.msra.mxu0 0
        %1576 = vmatprep.subr.bf16.mxu0 0
        %1577 = vmatpush1.bf16.msra.mxu0 0
        %1578 = vmatprep.subr.bf16.mxu0 0
        %1579 = vmatpush1.bf16.msra.mxu0 0
        %1580 = vmatprep.subr.bf16.mxu0 0
        %1581 = vmatpush1.bf16.msra.mxu0 0
        %1582 = vmatprep.subr.bf16.mxu0 0
        %1583 = vmatpush1.bf16.msra.mxu0 0
        %1584 = vmatprep.subr.bf16.mxu0 0
        %1585 = vmatpush1.bf16.msra.mxu0 0
        %1586 = vmatprep.subr.bf16.mxu0 0
        %1587 = vmatpush1.bf16.msra.mxu0 0
        %1588 = vmatprep.subr.bf16.mxu0 0
        %1589 = vmatpush1.bf16.msra.mxu0 0
        %1590 = vmatprep.subr.bf16.mxu0 0
        %1591 = vmatpush1.bf16.msra.mxu0 0
        %1592 = vmatprep.subr.bf16.mxu0 0
        %1593 = vmatpush1.bf16.msra.mxu0 0
        %1594 = vmatprep.subr.bf16.mxu0 0
        %1595 = vmatpush1.bf16.msra.mxu0 0
        %1596 = vmatprep.subr.bf16.mxu0 0
        %1597 = vmatpush1.bf16.msra.mxu0 0
        %1598 = vmatprep.mubr.bf16.mxu0 0
        %1599 = vmatmul.mubr.bf16.gmra.mrb[0].mxu0 %v1564
        %v1600 = vpop.f32.mrb[0].mxu0
        %v1601 = vadd.f32 0.0, %v1600
        %v1602 = vpop.f32.mrb[0].mxu0
        %v1603 = vpop.f32.mrb[0].mxu0
        %v1604 = vpop.f32.mrb[0].mxu0
        %1605 = vdwg.mxu0
        %v1606 = vadd.f32 %v1545, %v1601
        %1607 = vst.msk [vmem:[#allocation2] sm:$0xff] %vm853, %v1606
        // Predicated region
        $region89: #{tpu_custom_call.1} parent=83 // pred_check
          %p1608 = pneg %p757
        $region90: #{tpu_custom_call.1} parent=83 // pred_check_branch
          %1610 = sbr.rel (%p1608) target = $region92
        $region91: #{tpu_custom_call.1} parent=83 // pred_region
          %v1611 = vld [vmem:[%s14] sm:$0x3f]
          %v1612 = vld [vmem:[%s704] sm:$0xff]
          %v1613 = vld [vmem:[#allocation2] sm:$0xff]
          %v1614 = vlaneseq
          %v1615 = vshrl.u32 %v1614, 7
          %v1616 = vsub.s32 0, %v1615
          %v1617 = vrot.slane %v1611, %v1616
          %v1618 = vadd.f32 %v1613, %v1617
          %v1619 = vadd.f32 %v1618, %v1612
          %v1620 = vsel %vm853, %v1619, 0.0
          %1621 = vadd.xlane.f32.xlu0 %v1620
          %v1622 = vpop.xlane.xlu0 %1621
          %v1623 = vrcp.pop 32.0
          %v1624 = vmul.f32 %v1622, %v1623
          %v1625 = vsub.f32 %v1619, %v1624
          %v1626 = vmul.f32 %v1625, %v1625
          %v1627 = vsel %vm853, %v1626, 0.0
          %1628 = vadd.xlane.f32.xlu0 %v1627
          %v1629 = vpop.xlane.xlu0 %1628
          %v1630 = vmul.f32 %v1629, %v1623
          %v1631 = vadd.f32 %v1630, 1e-12
          %v1632 = vrsqrt.pop %v1631
          %v1633 = vmul.f32 %v1625, %v1632
          %v1634 = vlaneseq
          %v1635 = vshrl.u32 %v1634, 7
          %v1636 = vsub.s32 1, %v1635
          %v1637 = vrot.slane %v1611, %v1636
          %v1638 = vmul.f32 %v1633, %v1637
          %v1639 = vlaneseq
          %v1640 = vshrl.u32 %v1639, 7
          %v1641 = vsub.s32 2, %v1640
          %v1642 = vrot.slane %v1611, %v1641
          %v1643 = vadd.f32 %v1638, %v1642
          %v1644 = vpack.c.bf16 %v1643, %v1643
          %v1645 = vld [vmem:[%s11] sm:$0xf]
          %v1646 = vld [vmem:[%s11 + $0x4] sm:$0xf]
          %v1647 = vld [vmem:[%s11 + $0x8] sm:$0xf]
          %v1648 = vld [vmem:[%s11 + $0xc] sm:$0xf]
          %v1649 = vld [vmem:[%s12] sm:$0xf]
          %v1650 = vld [vmem:[%s12 + $0x4] sm:$0xf]
          %v1651 = vld [vmem:[%s12 + $0x8] sm:$0xf]
          %v1652 = vld [vmem:[%s12 + $0xc] sm:$0xf]
          %v1653 = vld [vmem:[%s12 + $0x10] sm:$0xf]
          %v1654 = vld [vmem:[%s12 + $0x14] sm:$0xf]
          %v1661 = vunpack.c.l.b16 %v1649
          %v1662 = vunpack.c.l.b16 %v1650
          %v1663 = vunpack.c.l.b16 %v1651
          %v1664 = vunpack.c.l.b16 %v1652
          %v1665 = vunpack.c.l.b16 %v1653
          %v1666 = vunpack.c.l.b16 %v1654
          %v1667 = vpack.c.b16 %v1662, %v1661
          %v1668 = vpack.c.b16 %v1664, %v1663
          %v1669 = vpack.c.b16 %v1666, %v1665
          %1673 = vmatprep.subr.bf16.mxu0 0
          %1674 = vmatpush1.bf16.msra.mxu0 %v1667
          %1675 = vmatprep.subr.bf16.mxu0 0
          %1676 = vmatpush1.bf16.msra.mxu0 %v1668
          %1677 = vmatprep.subr.bf16.mxu0 0
          %1678 = vmatpush1.bf16.msra.mxu0 %v1669
          %1679 = vmatprep.subr.bf16.mxu0 0
          %1680 = vmatpush1.bf16.msra.mxu0 0
          %1681 = vmatprep.subr.bf16.mxu0 0
          %1682 = vmatpush1.bf16.msra.mxu0 0
          %1683 = vmatprep.subr.bf16.mxu0 0
          %1684 = vmatpush1.bf16.msra.mxu0 0
          %1685 = vmatprep.subr.bf16.mxu0 0
          %1686 = vmatpush1.bf16.msra.mxu0 0
          %1687 = vmatprep.subr.bf16.mxu0 0
          %1688 = vmatpush1.bf16.msra.mxu0 0
          %1689 = vmatprep.subr.bf16.mxu0 0
          %1690 = vmatpush1.bf16.msra.mxu0 0
          %1691 = vmatprep.subr.bf16.mxu0 0
          %1692 = vmatpush1.bf16.msra.mxu0 0
          %1693 = vmatprep.subr.bf16.mxu0 0
          %1694 = vmatpush1.bf16.msra.mxu0 0
          %1695 = vmatprep.subr.bf16.mxu0 0
          %1696 = vmatpush1.bf16.msra.mxu0 0
          %1697 = vmatprep.subr.bf16.mxu0 0
          %1698 = vmatpush1.bf16.msra.mxu0 0
          %1699 = vmatprep.subr.bf16.mxu0 0
          %1700 = vmatpush1.bf16.msra.mxu0 0
          %1701 = vmatprep.subr.bf16.mxu0 0
          %1702 = vmatpush1.bf16.msra.mxu0 0
          %1703 = vmatprep.subr.bf16.mxu0 0
          %1704 = vmatpush1.bf16.msra.mxu0 0
          %1705 = vmatprep.mubr.bf16.mxu0 0
          %1706 = vmatmul.mubr.bf16.gmra.mrb[0].mxu0 %v799
          %v1707 = vpop.f32.mrb[0].mxu0
          %v1708 = vadd.f32 0.0, %v1707
          %v1709 = vpop.f32.mrb[0].mxu0
          %v1710 = vpop.f32.mrb[0].mxu0
          %v1711 = vpop.f32.mrb[0].mxu0
          %1712 = vdwg.mxu0
          %v1717 = vunpack.c.l.b16 %v1645
          %v1718 = vunpack.c.l.b16 %v1646
          %v1719 = vunpack.c.l.b16 %v1647
          %v1720 = vunpack.c.l.b16 %v1648
          %v1721 = vpack.c.b16 %v1718, %v1717
          %v1722 = vpack.c.b16 %v1720, %v1719
          %v1726 = vsel %vm853, %v1644, 0
          %1728 = vmatprep.subr.bf16.mxu0 0
          %1729 = vmatpush1.bf16.msra.mxu0 %v1721
          %1730 = vmatprep.subr.bf16.mxu0 0
          %1731 = vmatpush1.bf16.msra.mxu0 %v1722
          %1732 = vmatprep.subr.bf16.mxu0 0
          %1733 = vmatpush1.bf16.msra.mxu0 0
          %1734 = vmatprep.subr.bf16.mxu0 0
          %1735 = vmatpush1.bf16.msra.mxu0 0
          %1736 = vmatprep.subr.bf16.mxu0 0
          %1737 = vmatpush1.bf16.msra.mxu0 0
          %1738 = vmatprep.subr.bf16.mxu0 0
          %1739 = vmatpush1.bf16.msra.mxu0 0
          %1740 = vmatprep.subr.bf16.mxu0 0
          %1741 = vmatpush1.bf16.msra.mxu0 0
          %1742 = vmatprep.subr.bf16.mxu0 0
          %1743 = vmatpush1.bf16.msra.mxu0 0
          %1744 = vmatprep.subr.bf16.mxu0 0
          %1745 = vmatpush1.bf16.msra.mxu0 0
          %1746 = vmatprep.subr.bf16.mxu0 0
          %1747 = vmatpush1.bf16.msra.mxu0 0
          %1748 = vmatprep.subr.bf16.mxu0 0
          %1749 = vmatpush1.bf16.msra.mxu0 0
          %1750 = vmatprep.subr.bf16.mxu0 0
          %1751 = vmatpush1.bf16.msra.mxu0 0
          %1752 = vmatprep.subr.bf16.mxu0 0
          %1753 = vmatpush1.bf16.msra.mxu0 0
          %1754 = vmatprep.subr.bf16.mxu0 0
          %1755 = vmatpush1.bf16.msra.mxu0 0
          %1756 = vmatprep.subr.bf16.mxu0 0
          %1757 = vmatpush1.bf16.msra.mxu0 0
          %1758 = vmatprep.subr.bf16.mxu0 0
          %1759 = vmatpush1.bf16.msra.mxu0 0
          %1760 = vmatprep.mubr.bf16.mxu0 0
          %1761 = vmatmul.mubr.bf16.gmra.mrb[0].mxu0 %v1726
          %v1762 = vpop.f32.mrb[0].mxu0
          %v1763 = vadd.f32 %v1708, %v1762
          %v1764 = vpop.f32.mrb[0].mxu0
          %v1765 = vpop.f32.mrb[0].mxu0
          %v1766 = vpop.f32.mrb[0].mxu0
          %1767 = vdwg.mxu0
          %v1768 = vld [vmem:[%s15] sm:$0x1]
          %v1770 = vlaneseq
          %v1771 = vshrl.u32 %v1770, 7
          %v1772 = vsub.s32 0, %v1771
          %v1773 = vrot.slane %v1768, %v1772
          %v1775 = vadd.f32 %v1763, %v1773
          %v1776 = vmul.f32 %v1775, 0.5
          %v1777 = vmul.f32 %v1775, 0.044715
          %v1778 = vmul.f32 %v1777, %v1775
          %v1779 = vmul.f32 %v1778, %v1775
          %v1780 = vadd.f32 %v1775, %v1779
          %v1781 = vmul.f32 %v1780, 0.7978846
          %v1782 = vtanh.pop %v1781
          %v1783 = vadd.f32 %v1782, 1.0
          %v1784 = vmul.f32 %v1776, %v1783
          %v1785 = vpack.c.bf16 %v1784, %v1784
          %v1786 = vld [vmem:[%s13] sm:$0xf]
          %v1787 = vld [vmem:[%s13 + $0x4] sm:$0xf]
          %v1788 = vld [vmem:[%s13 + $0x8] sm:$0xf]
          %v1789 = vld [vmem:[%s13 + $0xc] sm:$0xf]
          %v1790 = vld [vmem:[%s13 + $0x10] sm:$0xf]
          %v1791 = vld [vmem:[%s13 + $0x14] sm:$0xf]
          %v1792 = vld [vmem:[%s13 + $0x18] sm:$0xf]
          %v1793 = vld [vmem:[%s13 + $0x1c] sm:$0xf]
          %v1794 = vld [vmem:[%s13 + $0x20] sm:$0xf]
          %v1795 = vld [vmem:[%s13 + $0x24] sm:$0xf]
          %v1796 = vld [vmem:[%s13 + $0x28] sm:$0xf]
          %v1797 = vld [vmem:[%s13 + $0x2c] sm:$0xf]
          %v1798 = vld [vmem:[%s13 + $0x30] sm:$0xf]
          %v1799 = vld [vmem:[%s13 + $0x34] sm:$0xf]
          %v1800 = vld [vmem:[%s13 + $0x38] sm:$0xf]
          %v1801 = vld [vmem:[%s13 + $0x3c] sm:$0xf]
          %v1802 = vlaneseq
          %v1803 = vshrl.u32 %v1802, 7
          %v1804 = vsub.s32 3, %v1803
          %v1805 = vrot.slane %v1611, %v1804
          %v1822 = vunpack.c.l.b16 %v1786
          %v1823 = vunpack.c.l.b16 %v1787
          %v1824 = vunpack.c.l.b16 %v1788
          %v1825 = vunpack.c.l.b16 %v1789
          %v1826 = vunpack.c.l.b16 %v1790
          %v1827 = vunpack.c.l.b16 %v1791
          %v1828 = vunpack.c.l.b16 %v1792
          %v1829 = vunpack.c.l.b16 %v1793
          %v1830 = vunpack.c.l.b16 %v1794
          %v1831 = vunpack.c.l.b16 %v1795
          %v1832 = vunpack.c.l.b16 %v1796
          %v1833 = vunpack.c.l.b16 %v1797
          %v1834 = vunpack.c.l.b16 %v1798
          %v1835 = vunpack.c.l.b16 %v1799
          %v1836 = vunpack.c.l.b16 %v1800
          %v1837 = vunpack.c.l.b16 %v1801
          %v1838 = vpack.c.b16 %v1823, %v1822
          %v1839 = vpack.c.b16 %v1825, %v1824
          %v1840 = vpack.c.b16 %v1827, %v1826
          %v1841 = vpack.c.b16 %v1829, %v1828
          %v1842 = vpack.c.b16 %v1831, %v1830
          %v1843 = vpack.c.b16 %v1833, %v1832
          %v1844 = vpack.c.b16 %v1835, %v1834
          %v1845 = vpack.c.b16 %v1837, %v1836
          %1854 = vmatprep.subr.bf16.mxu0 0
          %1855 = vmatpush1.bf16.msra.mxu0 %v1838
          %1856 = vmatprep.subr.bf16.mxu0 0
          %1857 = vmatpush1.bf16.msra.mxu0 %v1839
          %1858 = vmatprep.subr.bf16.mxu0 0
          %1859 = vmatpush1.bf16.msra.mxu0 %v1840
          %1860 = vmatprep.subr.bf16.mxu0 0
          %1861 = vmatpush1.bf16.msra.mxu0 %v1841
          %1862 = vmatprep.subr.bf16.mxu0 0
          %1863 = vmatpush1.bf16.msra.mxu0 %v1842
          %1864 = vmatprep.subr.bf16.mxu0 0
          %1865 = vmatpush1.bf16.msra.mxu0 %v1843
          %1866 = vmatprep.subr.bf16.mxu0 0
          %1867 = vmatpush1.bf16.msra.mxu0 %v1844
          %1868 = vmatprep.subr.bf16.mxu0 0
          %1869 = vmatpush1.bf16.msra.mxu0 %v1845
          %1870 = vmatprep.subr.bf16.mxu0 0
          %1871 = vmatpush1.bf16.msra.mxu0 0
          %1872 = vmatprep.subr.bf16.mxu0 0
          %1873 = vmatpush1.bf16.msra.mxu0 0
          %1874 = vmatprep.subr.bf16.mxu0 0
          %1875 = vmatpush1.bf16.msra.mxu0 0
          %1876 = vmatprep.subr.bf16.mxu0 0
          %1877 = vmatpush1.bf16.msra.mxu0 0
          %1878 = vmatprep.subr.bf16.mxu0 0
          %1879 = vmatpush1.bf16.msra.mxu0 0
          %1880 = vmatprep.subr.bf16.mxu0 0
          %1881 = vmatpush1.bf16.msra.mxu0 0
          %1882 = vmatprep.subr.bf16.mxu0 0
          %1883 = vmatpush1.bf16.msra.mxu0 0
          %1884 = vmatprep.subr.bf16.mxu0 0
          %1885 = vmatpush1.bf16.msra.mxu0 0
          %1886 = vmatprep.mubr.bf16.mxu0 0
          %1887 = vmatmul.mubr.bf16.gmra.mrb[0].mxu0 %v1785
          %v1888 = vpop.f32.mrb[0].mxu0
          %v1889 = vadd.f32 %v1805, %v1888
          %v1890 = vpop.f32.mrb[0].mxu0
          %v1891 = vpop.f32.mrb[0].mxu0
          %v1892 = vpop.f32.mrb[0].mxu0
          %1893 = vdwg.mxu0
          %v1894 = vadd.f32 %v1889, %v1643
          %v1895 = vsel %vm853, %v1894, 0.0
          %1896 = vadd.xlane.f32.xlu0 %v1895
          %v1897 = vpop.xlane.xlu0 %1896
          %v1898 = vmul.f32 %v1897, %v1623
          %v1899 = vsub.f32 %v1894, %v1898
          %v1900 = vmul.f32 %v1899, %v1899
          %v1901 = vsel %vm853, %v1900, 0.0
          %1902 = vadd.xlane.f32.xlu0 %v1901
          %v1903 = vpop.xlane.xlu0 %1902
          %v1904 = vmul.f32 %v1903, %v1623
          %v1905 = vadd.f32 %v1904, 1e-12
          %v1906 = vrsqrt.pop %v1905
          %v1907 = vmul.f32 %v1899, %v1906
          %v1908 = vlaneseq
          %v1909 = vshrl.u32 %v1908, 7
          %v1910 = vsub.s32 4, %v1909
          %v1911 = vrot.slane %v1611, %v1910
          %v1912 = vmul.f32 %v1907, %v1911
          %v1913 = vlaneseq
          %v1914 = vshrl.u32 %v1913, 7
          %v1915 = vsub.s32 5, %v1914
          %v1916 = vrot.slane %v1611, %v1915
          %v1917 = vadd.f32 %v1912, %v1916
          %1918 = vst.msk [vmem:[%s697] sm:$0xff] %vm853, %v1917
        $region92: #{tpu_custom_call.1} parent=83 // pred_fallthru
          _
        %s1919 = sand.u32 %s456, 1
        %s1920 = scalar_lea.sflag [#allocation8], %s1919
        %s1921 = sand.u32 %s456, 1
        %s1922 = smul.addr %s1921, 8
        %s1923 = scalar_lea.vmem [#allocation7], %s1922
        // Predicated region
        $region93: #{tpu_custom_call.1} parent=83 // pred_check
          %p1924 = pneg %p466
        $region94: #{tpu_custom_call.1} parent=83 // pred_check_branch
          %1926 = sbr.rel (%p1924) target = $region96
        $region95: #{tpu_custom_call.1} parent=83 // pred_region
          %s1928 = ssub.s32 128, 128
          %1929 = vsyncadd %s1920, %s1928
          %s1930 = sadd.s32 %s36, %s35
          %s1931 = smul.addr %s1930, 128
          %s1932 = scalar_lea.hbm %s16, %s1931
          %s1934 = sshll.u32 %s1923, 4
          %s1935 = int_to_ptr.vmem [resolvable:$true] %s1934
          %1937 = dma.vmem_to_hbm [thread:$0]  %s1935, 128, %s1932, %s1920
        $region96: #{tpu_custom_call.1} parent=83 // pred_fallthru
          _
      $region84: #{tpu_custom_call.1} parent=5 // pred_fallthru
        _
      %p1938 = scmp.le.s32.totalorder 2, %s25
      // Predicated region
      $region97: #{tpu_custom_call.1} parent=5 // pred_check
        %p1939 = pneg %p1938
      $region98: #{tpu_custom_call.1} parent=5 // pred_check_branch
        %1941 = sbr.rel (%p1939) target = $region100
      $region99: #{tpu_custom_call.1} parent=5 // pred_region
        %s1942 = ssub.s32 %s25, 2
        // Predicated region
        $region101: #{tpu_custom_call.1} parent=99 // pred_check
          %p1943 = pneg %p472
        $region102: #{tpu_custom_call.1} parent=99 // pred_check_branch
          %1945 = sbr.rel (%p1943) target = $region104
        $region103: #{tpu_custom_call.1} parent=99 // pred_region
          %s1946 = sand.u32 %s457, 1
          %s1947 = scalar_lea.sflag [#allocation8], %s1946
          %s1948 = sand.u32 %s457, 1
          %s1949 = smul.addr %s1948, 8
          %s1950 = scalar_lea.vmem [#allocation7], %s1949
          %1951 = dma.done %s1947, 128
        $region104: #{tpu_custom_call.1} parent=99 // pred_fallthru
          _
      $region100: #{tpu_custom_call.1} parent=5 // pred_fallthru
        _
    $region6: #{tpu_custom_call.1} parent=1 // loop_footer
      %s29 = sadd.s32 1, %s25
    $region7: #{tpu_custom_call.1} parent=1 // loop_footer_branch
      %24 = sbr.rel target = $region3
    $region8: #{tpu_custom_call.1} parent=1 // loop_exit
      _
    %1952 = vsyncpa [#allocation8], 1
    %s1953 = scalar_lea.sflag [#allocation8], 1
    %1954 = vsyncpa %s1953, 1

</llo_original>
